<compile_context>
chip_gen: v5e
topology: v5e:2x2
jax: 0.10.0
libtpu: 0.0.40
codegen_flags: <defaults>
</compile_context>

<pallas_src>
import functools

import jax
import jax.numpy as jnp
from jax.experimental import pallas as pl
from jax.experimental.pallas import tpu as pltpu


def bottleneck_kernel(x_ref, w1_ref, b1_ref, w2_ref, b2_ref, w3_ref, b3_ref,
                      out_ref):
    """One batch element per grid step.

    x_ref  : (1, H, W, Cin)  compute-dtype (bf16) input block, Cin == 4*P
    w1_ref : (Cin, P)        conv1 weight (BN1 scale folded in)
    w2_ref : (9*P, P)        conv2 weight, taps packed along K (dy major, dx minor)
    w3_ref : (P, Cin)        conv3 weight (BN3 scale folded in)
    b*_ref : (1, C) f32      folded BN biases
    out_ref: (1, H, W, Cin)  f32 output block
    """
    _, H, W, Cin = x_ref.shape
    P = w1_ref.shape[1]
    HW = H * W
    cdt = x_ref.dtype

    x2d = x_ref[...].reshape(HW, Cin)                      # (HW, Cin) bf16

    # ---- conv1 (1x1) + bias + relu -----------------------------------
    o1 = jnp.dot(x2d, w1_ref[...], preferred_element_type=jnp.float32)
    o1 = jnp.maximum(o1 + b1_ref[...], 0.0)                # (HW, P) f32

    # ---- conv2 (3x3, pad=1, stride=1): pack taps into K = 9P ----------
    # column index of every flattened row (for W-boundary masking)
    col = jax.lax.broadcasted_iota(jnp.int32, (H, W, 1), 1).reshape(HW, 1)

    zrow = jnp.zeros((1, P), jnp.float32)
    # dx = 0 tap: o1[y, x-1]  (zero at x == 0; also kills the wrap at row 0)
    left = jnp.where(col == 0, 0.0,
                     jnp.concatenate([zrow, o1[:-1]], axis=0))
    # dx = 2 tap: o1[y, x+1]  (zero at x == W-1)
    right = jnp.where(col == W - 1, 0.0,
                      jnp.concatenate([o1[1:], zrow], axis=0))
    # A[r, dx*P:(dx+1)*P] = o1[y, x+dx-1]
    a = jnp.concatenate([left, o1, right], axis=1)          # (HW, 3P)

    zrows = jnp.zeros((W, 3 * P), jnp.float32)
    up = jnp.concatenate([zrows, a[:-W]], axis=0)            # A at image row y-1
    down = jnp.concatenate([a[W:], zrows], axis=0)           # A at image row y+1
    # patches[r, (dy*3+dx)*P + i] = o1[y+dy-1, x+dx-1, i]
    patches = jnp.concatenate([up, a, down], axis=1).astype(cdt)   # (HW, 9P)

    o2 = jnp.dot(patches, w2_ref[...], preferred_element_type=jnp.float32)
    o2 = jnp.maximum(o2 + b2_ref[...], 0.0).astype(cdt)      # (HW, P)

    # ---- conv3 (1x1) + bias + residual + relu --------------------------
    o3 = jnp.dot(o2, w3_ref[...], preferred_element_type=jnp.float32)
    o3 = o3 + b3_ref[...] + x2d.astype(jnp.float32)
    out_ref[...] = jnp.maximum(o3, 0.0).astype(out_ref.dtype).reshape(
        1, H, W, Cin)


@functools.partial(jax.jit, static_argnames=("compute_dtype",))
def bottleneck_forward_nhwc(x_nhwc, w1k, b1, w2_hwio, b2, w3k, b3,
                            compute_dtype=jnp.bfloat16):
    """NHWC bottleneck forward. Weights already BN-folded (see fold_* below)."""
    N, H, W, Cin = x_nhwc.shape
    P = w1k.shape[1]
    cdt = compute_dtype

    xq = x_nhwc.astype(cdt)
    w1q = w1k.astype(cdt)                                   # (Cin, P)
    w2q = w2_hwio.astype(cdt).reshape(9 * P, P)             # (9P, P), dy major
    w3q = w3k.astype(cdt)                                   # (P, Cin)
    b1f = b1.astype(jnp.float32)
    b2f = b2.astype(jnp.float32)
    b3f = b3.astype(jnp.float32)

    return pl.pallas_call(
        bottleneck_kernel,
        out_shape=jax.ShapeDtypeStruct((N, H, W, Cin), jnp.float32),
        grid=(N,),
        in_specs=[
            pl.BlockSpec((1, H, W, Cin), lambda n: (n, 0, 0, 0)),
            pl.BlockSpec((Cin, P), lambda n: (0, 0)),
            pl.BlockSpec((1, P), lambda n: (0, 0)),
            pl.BlockSpec((9 * P, P), lambda n: (0, 0)),
            pl.BlockSpec((1, P), lambda n: (0, 0)),
            pl.BlockSpec((P, Cin), lambda n: (0, 0)),
            pl.BlockSpec((1, Cin), lambda n: (0, 0)),
        ],
        out_specs=pl.BlockSpec((1, H, W, Cin), lambda n: (n, 0, 0, 0)),
        compiler_params=pltpu.CompilerParams(
            dimension_semantics=("parallel",),
            vmem_limit_bytes=32 * 1024 * 1024),
    )(xq, w1q, b1f, w2q, b2f, w3q, b3f)


def bottleneck_forward(x_nchw, w1k, b1, w2_hwio, b2, w3k, b3,
                       compute_dtype=jnp.bfloat16):
    """PyTorch-layout (NCHW) entry point.

    NOTE: when stacking Bottleneck blocks, keep activations NHWC across blocks
    and call bottleneck_forward_nhwc directly; the transposes here are full
    HBM round-trips and should only happen at network entry/exit.
    """
    x_nhwc = jnp.transpose(x_nchw, (0, 2, 3, 1))
    out = bottleneck_forward_nhwc(x_nhwc, w1k, b1, w2_hwio, b2, w3k, b3,
                                  compute_dtype=compute_dtype)
    return jnp.transpose(out, (0, 3, 1, 2))


def fold_bn(gamma, beta, mean, var, eps=1e-5):
    scale = gamma / jnp.sqrt(var + eps)
    return scale, beta - mean * scale


def fold_bottleneck_params(conv1_w, bn1, conv2_w, bn2, conv3_w, bn3, eps=1e-5):
    """Fold inference-mode BN into conv weights (PyTorch OIHW conv weights)."""
    s1, bb1 = fold_bn(bn1["gamma"], bn1["beta"], bn1["mean"], bn1["var"], eps)
    s2, bb2 = fold_bn(bn2["gamma"], bn2["beta"], bn2["mean"], bn2["var"], eps)
    s3, bb3 = fold_bn(bn3["gamma"], bn3["beta"], bn3["mean"], bn3["var"], eps)
    # conv1: (P, Cin, 1, 1) -> (Cin, P) * s1 (per out column)
    w1k = jnp.transpose(conv1_w[:, :, 0, 0], (1, 0)) * s1[None, :]
    # conv2: (P, P, 3, 3) OIHW -> (3, 3, I, O) HWIO, scale per O
    w2_hwio = jnp.transpose(conv2_w, (2, 3, 1, 0)) * s2[None, None, None, :]
    # conv3: (4P, P, 1, 1) -> (P, 4P) * s3
    w3k = jnp.transpose(conv3_w[:, :, 0, 0], (1, 0)) * s3[None, :]
    return w1k, bb1[None, :], w2_hwio, bb2[None, :], w3k, bb3[None, :]


def reference_forward_nhwc(x_nhwc, w1k, b1, w2_hwio, b2, w3k, b3,
                           compute_dtype=jnp.bfloat16):
    """Pure-JAX (lax conv) reference with the same bf16 quantization."""
    Cin = x_nhwc.shape[-1]
    P = w1k.shape[1]
    dn = ("NHWC", "HWIO", "NHWC")
    f32 = jnp.float32
    xq = x_nhwc.astype(compute_dtype)

    o = jax.lax.conv_general_dilated(
        xq, w1k.astype(compute_dtype).reshape(1, 1, Cin, P), (1, 1), "VALID",
        dimension_numbers=dn, preferred_element_type=f32)
    o = jnp.maximum(o + b1, 0.0).astype(compute_dtype)

    o = jax.lax.conv_general_dilated(
        o, w2_hwio.astype(compute_dtype), (1, 1), [(1, 1), (1, 1)],
        dimension_numbers=dn, preferred_element_type=f32)
    o = jnp.maximum(o + b2, 0.0).astype(compute_dtype)

    o = jax.lax.conv_general_dilated(
        o, w3k.astype(compute_dtype).reshape(1, 1, P, Cin), (1, 1), "VALID",
        dimension_numbers=dn, preferred_element_type=f32)
    o = o + b3 + xq.astype(f32)
    return jnp.maximum(o, 0.0)


if __name__ == "__main__":
    # Small config: planes=4, inplanes=planes*4=16 (required when
    # downsample=None), batch=2, spatial 16x16.
    N, planes, H, W = 2, 4, 16, 16
    inplanes = planes * 4

    key = jax.random.PRNGKey(0)
    ks = jax.random.split(key, 8)

    x_nchw = jax.random.normal(ks[0], (N, inplanes, H, W), jnp.float32)
    conv1_w = 0.2 * jax.random.normal(ks[1], (planes, inplanes, 1, 1), jnp.float32)
    conv2_w = 0.2 * jax.random.normal(ks[2], (planes, planes, 3, 3), jnp.float32)
    conv3_w = 0.2 * jax.random.normal(ks[3], (inplanes, planes, 1, 1), jnp.float32)

    def bn_params(k, c):
        k1, k2, k3, k4 = jax.random.split(k, 4)
        return dict(
            gamma=1.0 + 0.1 * jax.random.normal(k1, (c,), jnp.float32),
            beta=0.1 * jax.random.normal(k2, (c,), jnp.float32),
            mean=0.1 * jax.random.normal(k3, (c,), jnp.float32),
            var=jnp.abs(1.0 + 0.1 * jax.random.normal(k4, (c,), jnp.float32)))

    bn1 = bn_params(ks[4], planes)
    bn2 = bn_params(ks[5], planes)
    bn3 = bn_params(ks[6], inplanes)

    w1k, b1, w2_hwio, b2, w3k, b3 = fold_bottleneck_params(
        conv1_w, bn1, conv2_w, bn2, conv3_w, bn3)

    out = bottleneck_forward(x_nchw, w1k, b1, w2_hwio, b2, w3k, b3)
    out = jax.block_until_ready(out)

    x_nhwc = jnp.transpose(x_nchw, (0, 2, 3, 1))
    ref = jnp.transpose(
        reference_forward_nhwc(x_nhwc, w1k, b1, w2_hwio, b2, w3k, b3),
        (0, 3, 1, 2))

    assert out.shape == (N, inplanes, H, W)
    err = float(jnp.max(jnp.abs(out - ref)))
    assert err < 5e-2, err
    print("KERNEL_OK")
</pallas_src>

<mosaic_0001>
module attributes {stable_mosaic.version = 11 : i64} {
  func.func @bottleneck_kernel(%arg0: i32, %arg1: memref<1x16x16x16xbf16, #tpu.memory_space<vmem>>, %arg2: memref<16x4xbf16, #tpu.memory_space<vmem>>, %arg3: memref<1x4xf32, #tpu.memory_space<vmem>>, %arg4: memref<36x4xbf16, #tpu.memory_space<vmem>>, %arg5: memref<1x4xf32, #tpu.memory_space<vmem>>, %arg6: memref<4x16xbf16, #tpu.memory_space<vmem>>, %arg7: memref<1x16xf32, #tpu.memory_space<vmem>>, %arg8: memref<1x16x16x16xf32, #tpu.memory_space<vmem>>) attributes {dimension_semantics = [#tpu.dimension_semantics<parallel>], iteration_bounds = array<i64: 2>, scalar_prefetch = 0 : i64, scratch_operands = 0 : i64, tpu.core_type = #tpu.core_type<tc>, window_params = [{transform_indices = @transform_0, window_bounds = array<i64: 1, 16, 16, 16>}, {pipeline_mode = #tpu.pipeline_mode<synchronous>, transform_indices = @transform_1, window_bounds = array<i64: 16, 4>}, {pipeline_mode = #tpu.pipeline_mode<synchronous>, transform_indices = @transform_2, window_bounds = array<i64: 1, 4>}, {pipeline_mode = #tpu.pipeline_mode<synchronous>, transform_indices = @transform_3, window_bounds = array<i64: 36, 4>}, {pipeline_mode = #tpu.pipeline_mode<synchronous>, transform_indices = @transform_4, window_bounds = array<i64: 1, 4>}, {pipeline_mode = #tpu.pipeline_mode<synchronous>, transform_indices = @transform_5, window_bounds = array<i64: 4, 16>}, {pipeline_mode = #tpu.pipeline_mode<synchronous>, transform_indices = @transform_6, window_bounds = array<i64: 1, 16>}, {transform_indices = @transform_7, window_bounds = array<i64: 1, 16, 16, 16>}]} {
    %c0 = arith.constant 0 : index
    %c0_0 = arith.constant 0 : index
    %c0_1 = arith.constant 0 : index
    %c0_2 = arith.constant 0 : index
    %0 = vector.load %arg1[%c0, %c0_0, %c0_1, %c0_2] : memref<1x16x16x16xbf16, #tpu.memory_space<vmem>>, vector<1x16x16x16xbf16>
    %1 = vector.shape_cast %0 : vector<1x16x16x16xbf16> to vector<256x16xbf16>
    %c0_3 = arith.constant 0 : index
    %c0_4 = arith.constant 0 : index
    %2 = vector.load %arg2[%c0_3, %c0_4] : memref<16x4xbf16, #tpu.memory_space<vmem>>, vector<16x4xbf16>
    %cst = arith.constant dense<0.000000e+00> : vector<256x4xf32>
    %3 = tpu.matmul %1, %2, %cst {dimension_numbers = #tpu.dot_dimension_numbers<[1], [0], [0], [1], [0, 0, 1, 1], [], []>} : vector<256x16xbf16>, vector<16x4xbf16>, vector<256x4xf32> -> vector<256x4xf32>
    %c0_5 = arith.constant 0 : index
    %c0_6 = arith.constant 0 : index
    %4 = vector.load %arg3[%c0_5, %c0_6] : memref<1x4xf32, #tpu.memory_space<vmem>>, vector<1x4xf32>
    %5 = vector.broadcast %4 : vector<1x4xf32> to vector<256x4xf32>
    %6 = arith.addf %3, %5 : vector<256x4xf32>
    %cst_7 = arith.constant 0.000000e+00 : f32
    %7 = vector.broadcast %cst_7 : f32 to vector<256x4xf32>
    %8 = arith.maximumf %6, %7 : vector<256x4xf32>
    %9 = tpu.iota {dimensions = array<i32: 1>} : vector<16x16x1xi32>
    %10 = vector.shape_cast %9 : vector<16x16x1xi32> to vector<256x1xi32>
    %cst_8 = arith.constant 0.000000e+00 : f32
    %11 = vector.broadcast %cst_8 : f32 to vector<1x4xf32>
    %c0_i32 = arith.constant 0 : i32
    %12 = vector.broadcast %c0_i32 : i32 to vector<256x1xi32>
    %13 = arith.cmpi eq, %10, %12 : vector<256x1xi32>
    %14 = vector.extract_strided_slice %8 {offsets = [0, 0], sizes = [255, 4], strides = [1, 1]} : vector<256x4xf32> to vector<255x4xf32>
    %15 = tpu.concatenate %11, %14 in 0 : vector<1x4xf32>, vector<255x4xf32> -> vector<256x4xf32>
    %cst_9 = arith.constant 0.000000e+00 : f32
    %16 = vector.shape_cast %13 : vector<256x1xi1> to vector<256x1xi1>
    %17 = vector.broadcast %16 : vector<256x1xi1> to vector<256x4xi1>
    %18 = vector.broadcast %cst_9 : f32 to vector<256x4xf32>
    %19 = arith.select %17, %18, %15 : vector<256x4xi1>, vector<256x4xf32>
    %c15_i32 = arith.constant 15 : i32
    %20 = vector.broadcast %c15_i32 : i32 to vector<256x1xi32>
    %21 = arith.cmpi eq, %10, %20 : vector<256x1xi32>
    %22 = vector.extract_strided_slice %8 {offsets = [1, 0], sizes = [255, 4], strides = [1, 1]} : vector<256x4xf32> to vector<255x4xf32>
    %23 = tpu.concatenate %22, %11 in 0 : vector<255x4xf32>, vector<1x4xf32> -> vector<256x4xf32>
    %cst_10 = arith.constant 0.000000e+00 : f32
    %24 = vector.shape_cast %21 : vector<256x1xi1> to vector<256x1xi1>
    %25 = vector.broadcast %24 : vector<256x1xi1> to vector<256x4xi1>
    %26 = vector.broadcast %cst_10 : f32 to vector<256x4xf32>
    %27 = arith.select %25, %26, %23 : vector<256x4xi1>, vector<256x4xf32>
    %28 = tpu.concatenate %19, %8, %27 in 1 : vector<256x4xf32>, vector<256x4xf32>, vector<256x4xf32> -> vector<256x12xf32>
    %cst_11 = arith.constant 0.000000e+00 : f32
    %29 = vector.broadcast %cst_11 : f32 to vector<16x12xf32>
    %30 = vector.extract_strided_slice %28 {offsets = [0, 0], sizes = [240, 12], strides = [1, 1]} : vector<256x12xf32> to vector<240x12xf32>
    %31 = tpu.concatenate %29, %30 in 0 : vector<16x12xf32>, vector<240x12xf32> -> vector<256x12xf32>
    %32 = vector.extract_strided_slice %28 {offsets = [16, 0], sizes = [240, 12], strides = [1, 1]} : vector<256x12xf32> to vector<240x12xf32>
    %33 = tpu.concatenate %32, %29 in 0 : vector<240x12xf32>, vector<16x12xf32> -> vector<256x12xf32>
    %34 = tpu.concatenate %31, %28, %33 in 1 : vector<256x12xf32>, vector<256x12xf32>, vector<256x12xf32> -> vector<256x36xf32>
    %35 = arith.truncf %34 : vector<256x36xf32> to vector<256x36xbf16>
    %c0_12 = arith.constant 0 : index
    %c0_13 = arith.constant 0 : index
    %36 = vector.load %arg4[%c0_12, %c0_13] : memref<36x4xbf16, #tpu.memory_space<vmem>>, vector<36x4xbf16>
    %cst_14 = arith.constant dense<0.000000e+00> : vector<256x4xf32>
    %37 = tpu.matmul %35, %36, %cst_14 {dimension_numbers = #tpu.dot_dimension_numbers<[1], [0], [0], [1], [0, 0, 1, 1], [], []>} : vector<256x36xbf16>, vector<36x4xbf16>, vector<256x4xf32> -> vector<256x4xf32>
    %c0_15 = arith.constant 0 : index
    %c0_16 = arith.constant 0 : index
    %38 = vector.load %arg5[%c0_15, %c0_16] : memref<1x4xf32, #tpu.memory_space<vmem>>, vector<1x4xf32>
    %39 = vector.broadcast %38 : vector<1x4xf32> to vector<256x4xf32>
    %40 = arith.addf %37, %39 : vector<256x4xf32>
    %cst_17 = arith.constant 0.000000e+00 : f32
    %41 = vector.broadcast %cst_17 : f32 to vector<256x4xf32>
    %42 = arith.maximumf %40, %41 : vector<256x4xf32>
    %43 = arith.truncf %42 : vector<256x4xf32> to vector<256x4xbf16>
    %c0_18 = arith.constant 0 : index
    %c0_19 = arith.constant 0 : index
    %44 = vector.load %arg6[%c0_18, %c0_19] : memref<4x16xbf16, #tpu.memory_space<vmem>>, vector<4x16xbf16>
    %cst_20 = arith.constant dense<0.000000e+00> : vector<256x16xf32>
    %45 = tpu.matmul %43, %44, %cst_20 {dimension_numbers = #tpu.dot_dimension_numbers<[1], [0], [0], [1], [0, 0, 1, 1], [], []>} : vector<256x4xbf16>, vector<4x16xbf16>, vector<256x16xf32> -> vector<256x16xf32>
    %c0_21 = arith.constant 0 : index
    %c0_22 = arith.constant 0 : index
    %46 = vector.load %arg7[%c0_21, %c0_22] : memref<1x16xf32, #tpu.memory_space<vmem>>, vector<1x16xf32>
    %47 = vector.broadcast %46 : vector<1x16xf32> to vector<256x16xf32>
    %48 = arith.addf %45, %47 : vector<256x16xf32>
    %49 = arith.extf %1 : vector<256x16xbf16> to vector<256x16xf32>
    %50 = arith.addf %48, %49 : vector<256x16xf32>
    %cst_23 = arith.constant 0.000000e+00 : f32
    %51 = vector.broadcast %cst_23 : f32 to vector<256x16xf32>
    %52 = arith.maximumf %50, %51 : vector<256x16xf32>
    %53 = vector.shape_cast %52 : vector<256x16xf32> to vector<1x16x16x16xf32>
    %c0_24 = arith.constant 0 : index
    %c0_25 = arith.constant 0 : index
    %c0_26 = arith.constant 0 : index
    %c0_27 = arith.constant 0 : index
    %54 = vector.load %arg8[%c0_24, %c0_25, %c0_26, %c0_27] : memref<1x16x16x16xf32, #tpu.memory_space<vmem>>, vector<1x16x16x16xf32>
    tpu.vector_store %arg8[%c0_24, %c0_25, %c0_26, %c0_27], %53 {strides = array<i32>} : memref<1x16x16x16xf32, #tpu.memory_space<vmem>>, vector<1x16x16x16xf32>,
    return
  }
  func.func @transform_0(%arg0: i32) -> (i32, i32, i32, i32) {
    %c0_i32 = arith.constant 0 : i32
    %c0_i32_0 = arith.constant 0 : i32
    %c0_i32_1 = arith.constant 0 : i32
    %c0_i32_2 = arith.constant 0 : i32
    return %arg0, %c0_i32, %c0_i32_0, %c0_i32_1 : i32, i32, i32, i32
  }
  func.func @transform_1(%arg0: i32) -> (i32, i32) {
    %c0_i32 = arith.constant 0 : i32
    %c0_i32_0 = arith.constant 0 : i32
    %c0_i32_1 = arith.constant 0 : i32
    return %c0_i32, %c0_i32_0 : i32, i32
  }
  func.func @transform_2(%arg0: i32) -> (i32, i32) {
    %c0_i32 = arith.constant 0 : i32
    %c0_i32_0 = arith.constant 0 : i32
    %c0_i32_1 = arith.constant 0 : i32
    return %c0_i32, %c0_i32_0 : i32, i32
  }
  func.func @transform_3(%arg0: i32) -> (i32, i32) {
    %c0_i32 = arith.constant 0 : i32
    %c0_i32_0 = arith.constant 0 : i32
    %c0_i32_1 = arith.constant 0 : i32
    return %c0_i32, %c0_i32_0 : i32, i32
  }
  func.func @transform_4(%arg0: i32) -> (i32, i32) {
    %c0_i32 = arith.constant 0 : i32
    %c0_i32_0 = arith.constant 0 : i32
    %c0_i32_1 = arith.constant 0 : i32
    return %c0_i32, %c0_i32_0 : i32, i32
  }
  func.func @transform_5(%arg0: i32) -> (i32, i32) {
    %c0_i32 = arith.constant 0 : i32
    %c0_i32_0 = arith.constant 0 : i32
    %c0_i32_1 = arith.constant 0 : i32
    return %c0_i32, %c0_i32_0 : i32, i32
  }
  func.func @transform_6(%arg0: i32) -> (i32, i32) {
    %c0_i32 = arith.constant 0 : i32
    %c0_i32_0 = arith.constant 0 : i32
    %c0_i32_1 = arith.constant 0 : i32
    return %c0_i32, %c0_i32_0 : i32, i32
  }
  func.func @transform_7(%arg0: i32) -> (i32, i32, i32, i32) {
    %c0_i32 = arith.constant 0 : i32
    %c0_i32_0 = arith.constant 0 : i32
    %c0_i32_1 = arith.constant 0 : i32
    %c0_i32_2 = arith.constant 0 : i32
    return %arg0, %c0_i32, %c0_i32_0, %c0_i32_1 : i32, i32, i32, i32
  }
}

</mosaic_0001>

<llo_original>
// kernel: bottleneck_forward_nhwc.1
$region0: #{bottleneck_forward_nhwc.1}
  #allocation0 [shape = 'u32[]', space=smem, size = 0x4, offset = 0x4, fixed_abs, tag = 'smem constant byte address 0x4 - core index']
  #allocation1 [shape = 'u32[72,128]{1,0:T(1,128)}', space=vmem, size = 0x9000, scoped, tag = 'internal scratch']
  %s0 = inlined_call_operand.vmem [shape: bf16[2,16,16,16], index: 0, kind: input, shape index: {}]
  %s1 = inlined_call_operand.vmem [shape: bf16[16,4], index: 1, kind: input, shape index: {}]
  %s2 = inlined_call_operand.vmem [shape: f32[1,4], index: 2, kind: input, shape index: {}]
  %s3 = inlined_call_operand.vmem [shape: bf16[36,4], index: 3, kind: input, shape index: {}]
  %s4 = inlined_call_operand.vmem [shape: f32[1,4], index: 4, kind: input, shape index: {}]
  %s5 = inlined_call_operand.vmem [shape: bf16[4,16], index: 5, kind: input, shape index: {}]
  %s6 = inlined_call_operand.vmem [shape: f32[1,16], index: 6, kind: input, shape index: {}]
  %s7 = inlined_call_operand.hbm [shape: f32[2,16,16,16], index: 7, kind: output, shape index: {}]
  %s8 = sld [smem:[#allocation0]]
  $region61: #{bottleneck_forward_nhwc.1} parent=0
    _
  %s10 = ssub.s32 1, %s8
  %s11 = scalar_select 0, %s10, %s8
  $region1: #{bottleneck_forward_nhwc.1} parent=0
    #allocation2 [shape = 'u8[262144]{0}', space=vmem, size = 0x40000, scoped, tag = 'output window, operand 0']
    #allocation3 [shape = 's32[2]{0}', space=sflag, size = 0x8, scoped, tag = 'scoped memory for bottleneck_forward_nhwc.1']
    %12 = vsyncpa [#allocation3], 0
    %s13 = scalar_lea.sflag [#allocation3], 1
    %14 = vsyncpa %s13, 0
    loop: start=0, step=1, limit=4
    $region2: #{bottleneck_forward_nhwc.1} parent=1 // loop_pre_header
      _
    $region3: #{bottleneck_forward_nhwc.1} parent=1 // loop_header
      %s16 = sphi 0, %s20
      %p17 = scmp.ge.s32.totalorder %s16, 4
      %s26 = sphi 0, %s28
      %s29 = sphi 0, %s26
      %s30 = sphi 0, %s29
      %s46 = sphi 0, %s30
      %s50 = sphi 0, %s50
      %s52 = sphi 0, %s50
      %s53 = sphi 0, %s52
      %s67 = sphi 0, %s53
      %s71 = sphi 0, %s71
      %s73 = sphi 0, %s71
      %s74 = sphi 0, %s73
      %s88 = sphi 0, %s74
      %s92 = sphi 0, %s92
      %s94 = sphi 0, %s92
      %s95 = sphi 0, %s94
      %s109 = sphi 0, %s95
      %s113 = sphi 0, %s113
      %s115 = sphi 0, %s113
      %s116 = sphi 0, %s115
      %s130 = sphi 0, %s116
      %s134 = sphi 0, %s134
      %s136 = sphi 0, %s134
      %s137 = sphi 0, %s136
      %s151 = sphi 0, %s137
      %s155 = sphi 0, %s155
      %s157 = sphi 0, %s155
      %s158 = sphi 0, %s157
      %s172 = sphi 0, %s158
      %s178 = sphi 0, %s180
      %s181 = sphi 0, %s178
      %s182 = sphi 0, %s181
      %s198 = sphi 0, %s182
    $region4: #{bottleneck_forward_nhwc.1} parent=1 // loop_header_branch
      %19 = sbr.rel (%p17) target = $region8
    $region5: #{bottleneck_forward_nhwc.1} parent=1 // loop_body
      %s21 = ssub.s32 %s16, 1
      %s22 = ssub.s32 %s16, 2
      %s23 = sadd.s32 %s16, 1
      %s24 = ssub.s32 %s16, %s23
      %p25 = scmp.eq.s32.totalorder %s24, 0
      %s27 = sadd.s32 %s26, 1
      %s28 = scalar_select %p25, %s26, %s27
      %p31 = pneg %p25
      %p32 = scmp.eq.s32.totalorder %s16, 1
      %p33 = por %p31, %p32
      %p34 = scmp.ne.s32.totalorder %s26, %s29
      %p35 = scmp.eq.s32.totalorder %s16, 0
      %p36 = por %p34, %p35
      %p37 = scmp.ne.s32.totalorder %s26, %s29
      %p38 = scmp.eq.s32.totalorder %s21, 1
      %p39 = por %p37, %p38
      %p40 = scmp.ne.s32.totalorder %s29, %s30
      %p41 = scmp.eq.s32.totalorder %s21, 0
      %p42 = por %p40, %p41
      %p43 = scmp.ne.s32.totalorder %s29, %s30
      %p44 = scmp.eq.s32.totalorder %s22, 1
      %p45 = por %p43, %p44
      %p47 = scmp.ne.s32.totalorder %s30, %s46
      %p48 = scmp.eq.s32.totalorder %s22, 0
      %p49 = por %p47, %p48
      %s51 = sadd.s32 %s50, 1
      %p54 = scmp.eq.s32.totalorder %s16, 1
      %p55 = scmp.ne.s32.totalorder %s50, %s52
      %p56 = scmp.eq.s32.totalorder %s16, 0
      %p57 = por %p55, %p56
      %p58 = scmp.ne.s32.totalorder %s50, %s52
      %p59 = scmp.eq.s32.totalorder %s21, 1
      %p60 = por %p58, %p59
      %p61 = scmp.ne.s32.totalorder %s52, %s53
      %p62 = scmp.eq.s32.totalorder %s21, 0
      %p63 = por %p61, %p62
      %p64 = scmp.ne.s32.totalorder %s52, %s53
      %p65 = scmp.eq.s32.totalorder %s22, 1
      %p66 = por %p64, %p65
      %p68 = scmp.ne.s32.totalorder %s53, %s67
      %p69 = scmp.eq.s32.totalorder %s22, 0
      %p70 = por %p68, %p69
      %s72 = sadd.s32 %s71, 1
      %p75 = scmp.eq.s32.totalorder %s16, 1
      %p76 = scmp.ne.s32.totalorder %s71, %s73
      %p77 = scmp.eq.s32.totalorder %s16, 0
      %p78 = por %p76, %p77
      %p79 = scmp.ne.s32.totalorder %s71, %s73
      %p80 = scmp.eq.s32.totalorder %s21, 1
      %p81 = por %p79, %p80
      %p82 = scmp.ne.s32.totalorder %s73, %s74
      %p83 = scmp.eq.s32.totalorder %s21, 0
      %p84 = por %p82, %p83
      %p85 = scmp.ne.s32.totalorder %s73, %s74
      %p86 = scmp.eq.s32.totalorder %s22, 1
      %p87 = por %p85, %p86
      %p89 = scmp.ne.s32.totalorder %s74, %s88
      %p90 = scmp.eq.s32.totalorder %s22, 0
      %p91 = por %p89, %p90
      %s93 = sadd.s32 %s92, 1
      %p96 = scmp.eq.s32.totalorder %s16, 1
      %p97 = scmp.ne.s32.totalorder %s92, %s94
      %p98 = scmp.eq.s32.totalorder %s16, 0
      %p99 = por %p97, %p98
      %p100 = scmp.ne.s32.totalorder %s92, %s94
      %p101 = scmp.eq.s32.totalorder %s21, 1
      %p102 = por %p100, %p101
      %p103 = scmp.ne.s32.totalorder %s94, %s95
      %p104 = scmp.eq.s32.totalorder %s21, 0
      %p105 = por %p103, %p104
      %p106 = scmp.ne.s32.totalorder %s94, %s95
      %p107 = scmp.eq.s32.totalorder %s22, 1
      %p108 = por %p106, %p107
      %p110 = scmp.ne.s32.totalorder %s95, %s109
      %p111 = scmp.eq.s32.totalorder %s22, 0
      %p112 = por %p110, %p111
      %s114 = sadd.s32 %s113, 1
      %p117 = scmp.eq.s32.totalorder %s16, 1
      %p118 = scmp.ne.s32.totalorder %s113, %s115
      %p119 = scmp.eq.s32.totalorder %s16, 0
      %p120 = por %p118, %p119
      %p121 = scmp.ne.s32.totalorder %s113, %s115
      %p122 = scmp.eq.s32.totalorder %s21, 1
      %p123 = por %p121, %p122
      %p124 = scmp.ne.s32.totalorder %s115, %s116
      %p125 = scmp.eq.s32.totalorder %s21, 0
      %p126 = por %p124, %p125
      %p127 = scmp.ne.s32.totalorder %s115, %s116
      %p128 = scmp.eq.s32.totalorder %s22, 1
      %p129 = por %p127, %p128
      %p131 = scmp.ne.s32.totalorder %s116, %s130
      %p132 = scmp.eq.s32.totalorder %s22, 0
      %p133 = por %p131, %p132
      %s135 = sadd.s32 %s134, 1
      %p138 = scmp.eq.s32.totalorder %s16, 1
      %p139 = scmp.ne.s32.totalorder %s134, %s136
      %p140 = scmp.eq.s32.totalorder %s16, 0
      %p141 = por %p139, %p140
      %p142 = scmp.ne.s32.totalorder %s134, %s136
      %p143 = scmp.eq.s32.totalorder %s21, 1
      %p144 = por %p142, %p143
      %p145 = scmp.ne.s32.totalorder %s136, %s137
      %p146 = scmp.eq.s32.totalorder %s21, 0
      %p147 = por %p145, %p146
      %p148 = scmp.ne.s32.totalorder %s136, %s137
      %p149 = scmp.eq.s32.totalorder %s22, 1
      %p150 = por %p148, %p149
      %p152 = scmp.ne.s32.totalorder %s137, %s151
      %p153 = scmp.eq.s32.totalorder %s22, 0
      %p154 = por %p152, %p153
      %s156 = sadd.s32 %s155, 1
      %p159 = scmp.eq.s32.totalorder %s16, 1
      %p160 = scmp.ne.s32.totalorder %s155, %s157
      %p161 = scmp.eq.s32.totalorder %s16, 0
      %p162 = por %p160, %p161
      %p163 = scmp.ne.s32.totalorder %s155, %s157
      %p164 = scmp.eq.s32.totalorder %s21, 1
      %p165 = por %p163, %p164
      %p166 = scmp.ne.s32.totalorder %s157, %s158
      %p167 = scmp.eq.s32.totalorder %s21, 0
      %p168 = por %p166, %p167
      %p169 = scmp.ne.s32.totalorder %s157, %s158
      %p170 = scmp.eq.s32.totalorder %s22, 1
      %p171 = por %p169, %p170
      %p173 = scmp.ne.s32.totalorder %s158, %s172
      %p174 = scmp.eq.s32.totalorder %s22, 0
      %p175 = por %p173, %p174
      %s176 = ssub.s32 %s16, %s23
      %p177 = scmp.eq.s32.totalorder %s176, 0
      %s179 = sadd.s32 %s178, 1
      %s180 = scalar_select %p177, %s178, %s179
      %p183 = pneg %p177
      %p184 = scmp.eq.s32.totalorder %s16, 1
      %p185 = por %p183, %p184
      %p186 = scmp.ne.s32.totalorder %s178, %s181
      %p187 = scmp.eq.s32.totalorder %s16, 0
      %p188 = por %p186, %p187
      %p189 = scmp.ne.s32.totalorder %s178, %s181
      %p190 = scmp.eq.s32.totalorder %s21, 1
      %p191 = por %p189, %p190
      %p192 = scmp.ne.s32.totalorder %s181, %s182
      %p193 = scmp.eq.s32.totalorder %s21, 0
      %p194 = por %p192, %p193
      %p195 = scmp.ne.s32.totalorder %s181, %s182
      %p196 = scmp.eq.s32.totalorder %s22, 1
      %p197 = por %p195, %p196
      %p199 = scmp.ne.s32.totalorder %s182, %s198
      %p200 = scmp.eq.s32.totalorder %s22, 0
      %p201 = por %p199, %p200
      %p202 = scmp.le.s32.totalorder 1, %s16
      %p203 = scmp.lt.s32.totalorder %s16, 3
      %p204 = pnand %p202, %p203
      %p205 = pneg %p204
      // Predicated region
      $region9: #{bottleneck_forward_nhwc.1} parent=5 // pred_check
        _
      $region10: #{bottleneck_forward_nhwc.1} parent=5 // pred_check_branch
        %207 = sbr.rel (%p204) target = $region12
      $region11: #{bottleneck_forward_nhwc.1} parent=5 // pred_region
        %s208 = ssub.s32 %s16, 1
        // Predicated region
        $region13: #{bottleneck_forward_nhwc.1} parent=11 // pred_check
          %p209 = pneg %p63
        $region14: #{bottleneck_forward_nhwc.1} parent=11 // pred_check_branch
          %211 = sbr.rel (%p209) target = $region16
        $region15: #{bottleneck_forward_nhwc.1} parent=11 // pred_region
          _
        $region16: #{bottleneck_forward_nhwc.1} parent=11 // pred_fallthru
          _
        // Predicated region
        $region17: #{bottleneck_forward_nhwc.1} parent=11 // pred_check
          %p212 = pneg %p84
        $region18: #{bottleneck_forward_nhwc.1} parent=11 // pred_check_branch
          %214 = sbr.rel (%p212) target = $region20
        $region19: #{bottleneck_forward_nhwc.1} parent=11 // pred_region
          _
        $region20: #{bottleneck_forward_nhwc.1} parent=11 // pred_fallthru
          _
        // Predicated region
        $region21: #{bottleneck_forward_nhwc.1} parent=11 // pred_check
          %p215 = pneg %p105
        $region22: #{bottleneck_forward_nhwc.1} parent=11 // pred_check_branch
          %217 = sbr.rel (%p215) target = $region24
        $region23: #{bottleneck_forward_nhwc.1} parent=11 // pred_region
          _
        $region24: #{bottleneck_forward_nhwc.1} parent=11 // pred_fallthru
          _
        // Predicated region
        $region25: #{bottleneck_forward_nhwc.1} parent=11 // pred_check
          %p218 = pneg %p126
        $region26: #{bottleneck_forward_nhwc.1} parent=11 // pred_check_branch
          %220 = sbr.rel (%p218) target = $region28
        $region27: #{bottleneck_forward_nhwc.1} parent=11 // pred_region
          _
        $region28: #{bottleneck_forward_nhwc.1} parent=11 // pred_fallthru
          _
        // Predicated region
        $region29: #{bottleneck_forward_nhwc.1} parent=11 // pred_check
          %p221 = pneg %p147
        $region30: #{bottleneck_forward_nhwc.1} parent=11 // pred_check_branch
          %223 = sbr.rel (%p221) target = $region32
        $region31: #{bottleneck_forward_nhwc.1} parent=11 // pred_region
          _
        $region32: #{bottleneck_forward_nhwc.1} parent=11 // pred_fallthru
          _
        // Predicated region
        $region33: #{bottleneck_forward_nhwc.1} parent=11 // pred_check
          %p224 = pneg %p168
        $region34: #{bottleneck_forward_nhwc.1} parent=11 // pred_check_branch
          %226 = sbr.rel (%p224) target = $region36
        $region35: #{bottleneck_forward_nhwc.1} parent=11 // pred_region
          _
        $region36: #{bottleneck_forward_nhwc.1} parent=11 // pred_fallthru
          _
      $region12: #{bottleneck_forward_nhwc.1} parent=5 // pred_fallthru
        _
      %p227 = scmp.lt.s32.totalorder %s16, 2
      // Predicated region
      $region37: #{bottleneck_forward_nhwc.1} parent=5 // pred_check
        %p228 = pneg %p227
      $region38: #{bottleneck_forward_nhwc.1} parent=5 // pred_check_branch
        %230 = sbr.rel (%p228) target = $region40
      $region39: #{bottleneck_forward_nhwc.1} parent=5 // pred_region
        // Predicated region
        $region41: #{bottleneck_forward_nhwc.1} parent=39 // pred_check
          %p231 = pneg %p36
        $region42: #{bottleneck_forward_nhwc.1} parent=39 // pred_check_branch
          %233 = sbr.rel (%p231) target = $region44
        $region43: #{bottleneck_forward_nhwc.1} parent=39 // pred_region
          %p234 = scmp.lt.s32.totalorder %s16, 1
          %s235 = scalar_select %p234, %s16, 1
          %s236 = smul.addr %s235, 32
          %s237 = smul.addr %s236, 4
          %s238 = scalar_lea.vmem %s0, %s237
        $region44: #{bottleneck_forward_nhwc.1} parent=39 // pred_fallthru
          _
      $region40: #{bottleneck_forward_nhwc.1} parent=5 // pred_fallthru
        _
      %p239 = scmp.le.s32.totalorder 1, %s16
      %p240 = scmp.lt.s32.totalorder %s16, 3
      %p241 = pnand %p239, %p240
      %p242 = pneg %p241
      // Predicated region
      $region45: #{bottleneck_forward_nhwc.1} parent=5 // pred_check
        _
      $region46: #{bottleneck_forward_nhwc.1} parent=5 // pred_check_branch
        %244 = sbr.rel (%p241) target = $region48
      $region47: #{bottleneck_forward_nhwc.1} parent=5 // pred_region
        %s245 = ssub.s32 %s16, 1
        %p246 = scmp.lt.s32.totalorder %s21, 1
        %s247 = scalar_select %p246, %s21, 1
        %s248 = smul.addr %s247, 32
        %s249 = smul.addr %s248, 4
        %s250 = scalar_lea.vmem %s0, %s249
        %p251 = pneg %p42
        %p252 = pneg %p39
        %p253 = pneg %p63
        %p254 = pneg %p60
        %p255 = pneg %p84
        %p256 = pneg %p81
        %p257 = pneg %p105
        %p258 = pneg %p102
        %p259 = pneg %p126
        %p260 = pneg %p123
        %p261 = pneg %p147
        %p262 = pneg %p144
        %p263 = pneg %p168
        %p264 = pneg %p165
        %p265 = pneg %p194
        %p266 = pneg %p191
        %s267 = sand.u32 %s181, 1
        %s268 = scalar_lea.sflag [#allocation3], %s267
        %s269 = sand.u32 %s181, 1
        %s270 = smul.addr %s269, 256
        %s271 = scalar_lea.vmem [#allocation2], %s270
        %p272 = scmp.lt.s32.totalorder %s21, 1
        %s273 = scalar_select %p272, %s21, 1
        %s274 = smul.addr %s273, 32
        %s275 = smul.addr %s274, 4
        %s276 = scalar_lea.vmem %s0, %s275
        %v278 = vld [vmem:[%s276] sm:$0xf]
        %v279 = vld [vmem:[%s276 + $0x4] sm:$0xf]
        %v280 = vld [vmem:[%s276 + $0x8] sm:$0xf]
        %v281 = vld [vmem:[%s276 + $0xc] sm:$0xf]
        %v282 = vld [vmem:[%s276 + $0x10] sm:$0xf]
        %v283 = vld [vmem:[%s276 + $0x14] sm:$0xf]
        %v284 = vld [vmem:[%s276 + $0x18] sm:$0xf]
        %v285 = vld [vmem:[%s276 + $0x1c] sm:$0xf]
        %v286 = vld [vmem:[%s276 + $0x20] sm:$0xf]
        %v287 = vld [vmem:[%s276 + $0x24] sm:$0xf]
        %v288 = vld [vmem:[%s276 + $0x28] sm:$0xf]
        %v289 = vld [vmem:[%s276 + $0x2c] sm:$0xf]
        %v290 = vld [vmem:[%s276 + $0x30] sm:$0xf]
        %v291 = vld [vmem:[%s276 + $0x34] sm:$0xf]
        %v292 = vld [vmem:[%s276 + $0x38] sm:$0xf]
        %v293 = vld [vmem:[%s276 + $0x3c] sm:$0xf]
        %v294 = vld [vmem:[%s276 + $0x40] sm:$0xf]
        %v295 = vld [vmem:[%s276 + $0x44] sm:$0xf]
        %v296 = vld [vmem:[%s276 + $0x48] sm:$0xf]
        %v297 = vld [vmem:[%s276 + $0x4c] sm:$0xf]
        %v298 = vld [vmem:[%s276 + $0x50] sm:$0xf]
        %v299 = vld [vmem:[%s276 + $0x54] sm:$0xf]
        %v300 = vld [vmem:[%s276 + $0x58] sm:$0xf]
        %v301 = vld [vmem:[%s276 + $0x5c] sm:$0xf]
        %v302 = vld [vmem:[%s276 + $0x60] sm:$0xf]
        %v303 = vld [vmem:[%s276 + $0x64] sm:$0xf]
        %v304 = vld [vmem:[%s276 + $0x68] sm:$0xf]
        %v305 = vld [vmem:[%s276 + $0x6c] sm:$0xf]
        %v306 = vld [vmem:[%s276 + $0x70] sm:$0xf]
        %v307 = vld [vmem:[%s276 + $0x74] sm:$0xf]
        %v308 = vld [vmem:[%s276 + $0x78] sm:$0xf]
        %v309 = vld [vmem:[%s276 + $0x7c] sm:$0xf]
        %v310 = vld [vmem:[%s1] sm:$0xf]
        %v311 = vld [vmem:[%s1 + $0x4] sm:$0xf]
        %v312 = vld [vmem:[%s2] sm:$0x1]
        %v314 = vperm.slane %v312, 0
        %v348 = vunpack.c.l.b16 %v278
        %v349 = vunpack.c.l.b16 %v279
        %v350 = vunpack.c.l.b16 %v280
        %v351 = vunpack.c.l.b16 %v281
        %v352 = vunpack.c.l.b16 %v282
        %v353 = vunpack.c.l.b16 %v283
        %v354 = vunpack.c.l.b16 %v284
        %v355 = vunpack.c.l.b16 %v285
        %v356 = vunpack.c.l.b16 %v286
        %v357 = vunpack.c.l.b16 %v287
        %v358 = vunpack.c.l.b16 %v288
        %v359 = vunpack.c.l.b16 %v289
        %v360 = vunpack.c.l.b16 %v290
        %v361 = vunpack.c.l.b16 %v291
        %v362 = vunpack.c.l.b16 %v292
        %v363 = vunpack.c.l.b16 %v293
        %v364 = vunpack.c.l.b16 %v294
        %v365 = vunpack.c.l.b16 %v295
        %v366 = vunpack.c.l.b16 %v296
        %v367 = vunpack.c.l.b16 %v297
        %v368 = vunpack.c.l.b16 %v298
        %v369 = vunpack.c.l.b16 %v299
        %v370 = vunpack.c.l.b16 %v300
        %v371 = vunpack.c.l.b16 %v301
        %v372 = vunpack.c.l.b16 %v302
        %v373 = vunpack.c.l.b16 %v303
        %v374 = vunpack.c.l.b16 %v304
        %v375 = vunpack.c.l.b16 %v305
        %v376 = vunpack.c.l.b16 %v306
        %v377 = vunpack.c.l.b16 %v307
        %v378 = vunpack.c.l.b16 %v308
        %v379 = vunpack.c.l.b16 %v309
        %v380 = vpack.c.b16 %v349, %v348
        %v381 = vpack.c.b16 %v351, %v350
        %v382 = vpack.c.b16 %v353, %v352
        %v383 = vpack.c.b16 %v355, %v354
        %v384 = vpack.c.b16 %v357, %v356
        %v385 = vpack.c.b16 %v359, %v358
        %v386 = vpack.c.b16 %v361, %v360
        %v387 = vpack.c.b16 %v363, %v362
        %v388 = vpack.c.b16 %v365, %v364
        %v389 = vpack.c.b16 %v367, %v366
        %v390 = vpack.c.b16 %v369, %v368
        %v391 = vpack.c.b16 %v371, %v370
        %v392 = vpack.c.b16 %v373, %v372
        %v393 = vpack.c.b16 %v375, %v374
        %v394 = vpack.c.b16 %v377, %v376
        %v395 = vpack.c.b16 %v379, %v378
        %v398 = vunpack.c.l.b16 %v310
        %v399 = vunpack.c.l.b16 %v311
        %v400 = vpack.c.b16 %v399, %v398
        %vm402 = vcmask 130048
        %v404 = vsel %vm402, %v380, 0
        %v407 = vsel %vm402, %v381, 0
        %v410 = vsel %vm402, %v382, 0
        %v413 = vsel %vm402, %v383, 0
        %v416 = vsel %vm402, %v384, 0
        %v419 = vsel %vm402, %v385, 0
        %v422 = vsel %vm402, %v386, 0
        %v425 = vsel %vm402, %v387, 0
        %v428 = vsel %vm402, %v388, 0
        %v431 = vsel %vm402, %v389, 0
        %v434 = vsel %vm402, %v390, 0
        %v437 = vsel %vm402, %v391, 0
        %v440 = vsel %vm402, %v392, 0
        %v443 = vsel %vm402, %v393, 0
        %v446 = vsel %vm402, %v394, 0
        %v449 = vsel %vm402, %v395, 0
        %451 = vmatpush.bf16.msra.mxu0 0
        %452 = vmatpush.bf16.msra.mxu0 0
        %453 = vmatpush.bf16.msra.mxu0 0
        %454 = vmatpush.bf16.msra.mxu0 0
        %455 = vmatpush.bf16.msra.mxu0 0
        %456 = vmatpush.bf16.msra.mxu0 0
        %457 = vmatpush.bf16.msra.mxu0 0
        %458 = vmatpush.bf16.msra.mxu0 %v400
        %459 = vmatmul.bf16.gmra.mxu0 %v404
        %v460 = vpop.f32.mrf.mxu0
        %v461 = vadd.f32 %v314, %v460
        %v462 = vpop.f32.mrf.mxu0
        %v463 = vadd.f32 %v314, %v462
        %464 = vmatmul.bf16.gmra.mxu0 %v407
        %v465 = vpop.f32.mrf.mxu0
        %v466 = vadd.f32 %v314, %v465
        %v467 = vpop.f32.mrf.mxu0
        %v468 = vadd.f32 %v314, %v467
        %469 = vmatmul.bf16.gmra.mxu0 %v410
        %v470 = vpop.f32.mrf.mxu0
        %v471 = vadd.f32 %v314, %v470
        %v472 = vpop.f32.mrf.mxu0
        %v473 = vadd.f32 %v314, %v472
        %474 = vmatmul.bf16.gmra.mxu0 %v413
        %v475 = vpop.f32.mrf.mxu0
        %v476 = vadd.f32 %v314, %v475
        %v477 = vpop.f32.mrf.mxu0
        %v478 = vadd.f32 %v314, %v477
        %479 = vmatmul.bf16.gmra.mxu0 %v416
        %v480 = vpop.f32.mrf.mxu0
        %v481 = vadd.f32 %v314, %v480
        %v482 = vpop.f32.mrf.mxu0
        %v483 = vadd.f32 %v314, %v482
        %484 = vmatmul.bf16.gmra.mxu0 %v419
        %v485 = vpop.f32.mrf.mxu0
        %v486 = vadd.f32 %v314, %v485
        %v487 = vpop.f32.mrf.mxu0
        %v488 = vadd.f32 %v314, %v487
        %489 = vmatmul.bf16.gmra.mxu0 %v422
        %v490 = vpop.f32.mrf.mxu0
        %v491 = vadd.f32 %v314, %v490
        %v492 = vpop.f32.mrf.mxu0
        %v493 = vadd.f32 %v314, %v492
        %494 = vmatmul.bf16.gmra.mxu0 %v425
        %v495 = vpop.f32.mrf.mxu0
        %v496 = vadd.f32 %v314, %v495
        %v497 = vpop.f32.mrf.mxu0
        %v498 = vadd.f32 %v314, %v497
        %499 = vmatmul.bf16.gmra.mxu0 %v428
        %v500 = vpop.f32.mrf.mxu0
        %v501 = vadd.f32 %v314, %v500
        %v502 = vpop.f32.mrf.mxu0
        %v503 = vadd.f32 %v314, %v502
        %504 = vmatmul.bf16.gmra.mxu0 %v431
        %v505 = vpop.f32.mrf.mxu0
        %v506 = vadd.f32 %v314, %v505
        %v507 = vpop.f32.mrf.mxu0
        %v508 = vadd.f32 %v314, %v507
        %509 = vmatmul.bf16.gmra.mxu0 %v434
        %v510 = vpop.f32.mrf.mxu0
        %v511 = vadd.f32 %v314, %v510
        %v512 = vpop.f32.mrf.mxu0
        %v513 = vadd.f32 %v314, %v512
        %514 = vmatmul.bf16.gmra.mxu0 %v437
        %v515 = vpop.f32.mrf.mxu0
        %v516 = vadd.f32 %v314, %v515
        %v517 = vpop.f32.mrf.mxu0
        %v518 = vadd.f32 %v314, %v517
        %519 = vmatmul.bf16.gmra.mxu0 %v440
        %v520 = vpop.f32.mrf.mxu0
        %v521 = vadd.f32 %v314, %v520
        %v522 = vpop.f32.mrf.mxu0
        %v523 = vadd.f32 %v314, %v522
        %524 = vmatmul.bf16.gmra.mxu0 %v443
        %v525 = vpop.f32.mrf.mxu0
        %v526 = vadd.f32 %v314, %v525
        %v527 = vpop.f32.mrf.mxu0
        %v528 = vadd.f32 %v314, %v527
        %529 = vmatmul.bf16.gmra.mxu0 %v446
        %v530 = vpop.f32.mrf.mxu0
        %v531 = vadd.f32 %v314, %v530
        %v532 = vpop.f32.mrf.mxu0
        %v533 = vadd.f32 %v314, %v532
        %534 = vmatmul.bf16.gmra.mxu0 %v449
        %v535 = vpop.f32.mrf.mxu0
        %v536 = vadd.f32 %v314, %v535
        %v537 = vpop.f32.mrf.mxu0
        %v538 = vadd.f32 %v314, %v537
        %539 = vdwg.mxu0
        %v540 = vmax.f32 %v461, 0.0
        %v541 = vmax.f32 %v463, 0.0
        %v542 = vmax.f32 %v466, 0.0
        %v543 = vmax.f32 %v468, 0.0
        %v544 = vmax.f32 %v471, 0.0
        %v545 = vmax.f32 %v473, 0.0
        %v546 = vmax.f32 %v476, 0.0
        %v547 = vmax.f32 %v478, 0.0
        %v548 = vmax.f32 %v481, 0.0
        %v549 = vmax.f32 %v483, 0.0
        %v550 = vmax.f32 %v486, 0.0
        %v551 = vmax.f32 %v488, 0.0
        %v552 = vmax.f32 %v491, 0.0
        %v553 = vmax.f32 %v493, 0.0
        %v554 = vmax.f32 %v496, 0.0
        %v555 = vmax.f32 %v498, 0.0
        %v556 = vmax.f32 %v501, 0.0
        %v557 = vmax.f32 %v503, 0.0
        %v558 = vmax.f32 %v506, 0.0
        %v559 = vmax.f32 %v508, 0.0
        %v560 = vmax.f32 %v511, 0.0
        %v561 = vmax.f32 %v513, 0.0
        %v562 = vmax.f32 %v516, 0.0
        %v563 = vmax.f32 %v518, 0.0
        %v564 = vmax.f32 %v521, 0.0
        %v565 = vmax.f32 %v523, 0.0
        %v566 = vmax.f32 %v526, 0.0
        %v567 = vmax.f32 %v528, 0.0
        %v568 = vmax.f32 %v531, 0.0
        %v569 = vmax.f32 %v533, 0.0
        %v570 = vmax.f32 %v536, 0.0
        %v571 = vmax.f32 %v538, 0.0
        %v572 = vlaneseq
        %v573 = vshrl.u32 %v572, 7
        %v574 = vadd.s32 %v573, 8
        %vm575 = vcmp.eq.s32.totalorder %v573, 0
        %vm576 = vcmp.eq.s32.totalorder %v574, 0
        %vm609 = vcmask 1040384
        %v610 = vrot.slane %v540, 7
        %v611 = vrot.slane %v541, 7
        %v612 = vsel %vm609, %v610, %v611
        %v613 = vrot.slane %v542, 7
        %v614 = vsel %vm609, %v611, %v613
        %v615 = vrot.slane %v543, 7
        %v616 = vsel %vm609, %v613, %v615
        %v617 = vrot.slane %v544, 7
        %v618 = vsel %vm609, %v615, %v617
        %v619 = vrot.slane %v545, 7
        %v620 = vsel %vm609, %v617, %v619
        %v621 = vrot.slane %v546, 7
        %v622 = vsel %vm609, %v619, %v621
        %v623 = vrot.slane %v547, 7
        %v624 = vsel %vm609, %v621, %v623
        %v625 = vrot.slane %v548, 7
        %v626 = vsel %vm609, %v623, %v625
        %v627 = vrot.slane %v549, 7
        %v628 = vsel %vm609, %v625, %v627
        %v629 = vrot.slane %v550, 7
        %v630 = vsel %vm609, %v627, %v629
        %v631 = vrot.slane %v551, 7
        %v632 = vsel %vm609, %v629, %v631
        %v633 = vrot.slane %v552, 7
        %v634 = vsel %vm609, %v631, %v633
        %v635 = vrot.slane %v553, 7
        %v636 = vsel %vm609, %v633, %v635
        %v637 = vrot.slane %v554, 7
        %v638 = vsel %vm609, %v635, %v637
        %v639 = vrot.slane %v555, 7
        %v640 = vsel %vm609, %v637, %v639
        %v641 = vrot.slane %v556, 7
        %v642 = vsel %vm609, %v639, %v641
        %v643 = vrot.slane %v557, 7
        %v644 = vsel %vm609, %v641, %v643
        %v645 = vrot.slane %v558, 7
        %v646 = vsel %vm609, %v643, %v645
        %v647 = vrot.slane %v559, 7
        %v648 = vsel %vm609, %v645, %v647
        %v649 = vrot.slane %v560, 7
        %v650 = vsel %vm609, %v647, %v649
        %v651 = vrot.slane %v561, 7
        %v652 = vsel %vm609, %v649, %v651
        %v653 = vrot.slane %v562, 7
        %v654 = vsel %vm609, %v651, %v653
        %v655 = vrot.slane %v563, 7
        %v656 = vsel %vm609, %v653, %v655
        %v657 = vrot.slane %v564, 7
        %v658 = vsel %vm609, %v655, %v657
        %v659 = vrot.slane %v565, 7
        %v660 = vsel %vm609, %v657, %v659
        %v661 = vrot.slane %v566, 7
        %v662 = vsel %vm609, %v659, %v661
        %v663 = vrot.slane %v567, 7
        %v664 = vsel %vm609, %v661, %v663
        %v665 = vrot.slane %v568, 7
        %v666 = vsel %vm609, %v663, %v665
        %v667 = vrot.slane %v569, 7
        %v668 = vsel %vm609, %v665, %v667
        %v669 = vrot.slane %v570, 7
        %v670 = vsel %vm609, %v667, %v669
        %v671 = vrot.slane %v571, 7
        %v672 = vsel %vm609, %v669, %v671
        %v705 = vsel %vm609, 0.0, %v610
        %v706 = vsel %vm575, 1, 0
        %v707 = vsel %vm576, 1, 0
        %vm708 = vcmp.eq.s32.totalorder %v706, 1
        %vm709 = vcmp.eq.s32.totalorder %v707, 1
        %v710 = vsel %vm708, 0.0, %v705
        %v711 = vsel %vm709, 0.0, %v612
        %v712 = vsel %vm708, 0.0, %v614
        %v713 = vsel %vm709, 0.0, %v616
        %v714 = vsel %vm708, 0.0, %v618
        %v715 = vsel %vm709, 0.0, %v620
        %v716 = vsel %vm708, 0.0, %v622
        %v717 = vsel %vm709, 0.0, %v624
        %v718 = vsel %vm708, 0.0, %v626
        %v719 = vsel %vm709, 0.0, %v628
        %v720 = vsel %vm708, 0.0, %v630
        %v721 = vsel %vm709, 0.0, %v632
        %v722 = vsel %vm708, 0.0, %v634
        %v723 = vsel %vm709, 0.0, %v636
        %v724 = vsel %vm708, 0.0, %v638
        %v725 = vsel %vm709, 0.0, %v640
        %v726 = vsel %vm708, 0.0, %v642
        %v727 = vsel %vm709, 0.0, %v644
        %v728 = vsel %vm708, 0.0, %v646
        %v729 = vsel %vm709, 0.0, %v648
        %v730 = vsel %vm708, 0.0, %v650
        %v731 = vsel %vm709, 0.0, %v652
        %v732 = vsel %vm708, 0.0, %v654
        %v733 = vsel %vm709, 0.0, %v656
        %v734 = vsel %vm708, 0.0, %v658
        %v735 = vsel %vm709, 0.0, %v660
        %v736 = vsel %vm708, 0.0, %v662
        %v737 = vsel %vm709, 0.0, %v664
        %v738 = vsel %vm708, 0.0, %v666
        %v739 = vsel %vm709, 0.0, %v668
        %v740 = vsel %vm708, 0.0, %v670
        %v741 = vsel %vm709, 0.0, %v672
        %vm742 = vcmp.eq.s32.totalorder %v573, 15
        %vm743 = vcmp.eq.s32.totalorder %v574, 15
        %vm744 = vcmask 1046528
        %v745 = vrot.slane %v540, 1
        %v746 = vrot.slane %v541, 1
        %v747 = vsel %vm744, %v745, %v746
        %v748 = vrot.slane %v542, 1
        %v749 = vsel %vm744, %v746, %v748
        %v750 = vrot.slane %v543, 1
        %v751 = vsel %vm744, %v748, %v750
        %v752 = vrot.slane %v544, 1
        %v753 = vsel %vm744, %v750, %v752
        %v754 = vrot.slane %v545, 1
        %v755 = vsel %vm744, %v752, %v754
        %v756 = vrot.slane %v546, 1
        %v757 = vsel %vm744, %v754, %v756
        %v758 = vrot.slane %v547, 1
        %v759 = vsel %vm744, %v756, %v758
        %v760 = vrot.slane %v548, 1
        %v761 = vsel %vm744, %v758, %v760
        %v762 = vrot.slane %v549, 1
        %v763 = vsel %vm744, %v760, %v762
        %v764 = vrot.slane %v550, 1
        %v765 = vsel %vm744, %v762, %v764
        %v766 = vrot.slane %v551, 1
        %v767 = vsel %vm744, %v764, %v766
        %v768 = vrot.slane %v552, 1
        %v769 = vsel %vm744, %v766, %v768
        %v770 = vrot.slane %v553, 1
        %v771 = vsel %vm744, %v768, %v770
        %v772 = vrot.slane %v554, 1
        %v773 = vsel %vm744, %v770, %v772
        %v774 = vrot.slane %v555, 1
        %v775 = vsel %vm744, %v772, %v774
        %v776 = vrot.slane %v556, 1
        %v777 = vsel %vm744, %v774, %v776
        %v778 = vrot.slane %v557, 1
        %v779 = vsel %vm744, %v776, %v778
        %v780 = vrot.slane %v558, 1
        %v781 = vsel %vm744, %v778, %v780
        %v782 = vrot.slane %v559, 1
        %v783 = vsel %vm744, %v780, %v782
        %v784 = vrot.slane %v560, 1
        %v785 = vsel %vm744, %v782, %v784
        %v786 = vrot.slane %v561, 1
        %v787 = vsel %vm744, %v784, %v786
        %v788 = vrot.slane %v562, 1
        %v789 = vsel %vm744, %v786, %v788
        %v790 = vrot.slane %v563, 1
        %v791 = vsel %vm744, %v788, %v790
        %v792 = vrot.slane %v564, 1
        %v793 = vsel %vm744, %v790, %v792
        %v794 = vrot.slane %v565, 1
        %v795 = vsel %vm744, %v792, %v794
        %v796 = vrot.slane %v566, 1
        %v797 = vsel %vm744, %v794, %v796
        %v798 = vrot.slane %v567, 1
        %v799 = vsel %vm744, %v796, %v798
        %v800 = vrot.slane %v568, 1
        %v801 = vsel %vm744, %v798, %v800
        %v802 = vrot.slane %v569, 1
        %v803 = vsel %vm744, %v800, %v802
        %v804 = vrot.slane %v570, 1
        %v805 = vsel %vm744, %v802, %v804
        %v806 = vrot.slane %v571, 1
        %v807 = vsel %vm744, %v804, %v806
        %v840 = vsel %vm744, %v806, 0.0
        %v841 = vsel %vm742, 1, 0
        %v842 = vsel %vm743, 1, 0
        %vm843 = vcmp.eq.s32.totalorder %v841, 1
        %vm844 = vcmp.eq.s32.totalorder %v842, 1
        %v845 = vsel %vm843, 0.0, %v747
        %v846 = vsel %vm844, 0.0, %v749
        %v847 = vsel %vm843, 0.0, %v751
        %v848 = vsel %vm844, 0.0, %v753
        %v849 = vsel %vm843, 0.0, %v755
        %v850 = vsel %vm844, 0.0, %v757
        %v851 = vsel %vm843, 0.0, %v759
        %v852 = vsel %vm844, 0.0, %v761
        %v853 = vsel %vm843, 0.0, %v763
        %v854 = vsel %vm844, 0.0, %v765
        %v855 = vsel %vm843, 0.0, %v767
        %v856 = vsel %vm844, 0.0, %v769
        %v857 = vsel %vm843, 0.0, %v771
        %v858 = vsel %vm844, 0.0, %v773
        %v859 = vsel %vm843, 0.0, %v775
        %v860 = vsel %vm844, 0.0, %v777
        %v861 = vsel %vm843, 0.0, %v779
        %v862 = vsel %vm844, 0.0, %v781
        %v863 = vsel %vm843, 0.0, %v783
        %v864 = vsel %vm844, 0.0, %v785
        %v865 = vsel %vm843, 0.0, %v787
        %v866 = vsel %vm844, 0.0, %v789
        %v867 = vsel %vm843, 0.0, %v791
        %v868 = vsel %vm844, 0.0, %v793
        %v869 = vsel %vm843, 0.0, %v795
        %v870 = vsel %vm844, 0.0, %v797
        %v871 = vsel %vm843, 0.0, %v799
        %v872 = vsel %vm844, 0.0, %v801
        %v873 = vsel %vm843, 0.0, %v803
        %v874 = vsel %vm844, 0.0, %v805
        %v875 = vsel %vm843, 0.0, %v807
        %v876 = vsel %vm844, 0.0, %v840
        %877 = vrot.lane.b32.xlu0 %v540, 4
        %v878 = vpop.permute.xlu0 %877
        %879 = vrot.lane.b32.xlu0 %v541, 4
        %v880 = vpop.permute.xlu0 %879
        %881 = vrot.lane.b32.xlu0 %v542, 4
        %v882 = vpop.permute.xlu0 %881
        %883 = vrot.lane.b32.xlu0 %v543, 4
        %v884 = vpop.permute.xlu0 %883
        %885 = vrot.lane.b32.xlu0 %v544, 4
        %v886 = vpop.permute.xlu0 %885
        %887 = vrot.lane.b32.xlu0 %v545, 4
        %v888 = vpop.permute.xlu0 %887
        %889 = vrot.lane.b32.xlu0 %v546, 4
        %v890 = vpop.permute.xlu0 %889
        %891 = vrot.lane.b32.xlu0 %v547, 4
        %v892 = vpop.permute.xlu0 %891
        %893 = vrot.lane.b32.xlu0 %v548, 4
        %v894 = vpop.permute.xlu0 %893
        %895 = vrot.lane.b32.xlu0 %v549, 4
        %v896 = vpop.permute.xlu0 %895
        %897 = vrot.lane.b32.xlu0 %v550, 4
        %v898 = vpop.permute.xlu0 %897
        %899 = vrot.lane.b32.xlu0 %v551, 4
        %v900 = vpop.permute.xlu0 %899
        %901 = vrot.lane.b32.xlu0 %v552, 4
        %v902 = vpop.permute.xlu0 %901
        %903 = vrot.lane.b32.xlu0 %v553, 4
        %v904 = vpop.permute.xlu0 %903
        %905 = vrot.lane.b32.xlu0 %v554, 4
        %v906 = vpop.permute.xlu0 %905
        %907 = vrot.lane.b32.xlu0 %v555, 4
        %v908 = vpop.permute.xlu0 %907
        %909 = vrot.lane.b32.xlu0 %v556, 4
        %v910 = vpop.permute.xlu0 %909
        %911 = vrot.lane.b32.xlu0 %v557, 4
        %v912 = vpop.permute.xlu0 %911
        %913 = vrot.lane.b32.xlu0 %v558, 4
        %v914 = vpop.permute.xlu0 %913
        %915 = vrot.lane.b32.xlu0 %v559, 4
        %v916 = vpop.permute.xlu0 %915
        %917 = vrot.lane.b32.xlu0 %v560, 4
        %v918 = vpop.permute.xlu0 %917
        %919 = vrot.lane.b32.xlu0 %v561, 4
        %v920 = vpop.permute.xlu0 %919
        %921 = vrot.lane.b32.xlu0 %v562, 4
        %v922 = vpop.permute.xlu0 %921
        %923 = vrot.lane.b32.xlu0 %v563, 4
        %v924 = vpop.permute.xlu0 %923
        %925 = vrot.lane.b32.xlu0 %v564, 4
        %v926 = vpop.permute.xlu0 %925
        %927 = vrot.lane.b32.xlu0 %v565, 4
        %v928 = vpop.permute.xlu0 %927
        %929 = vrot.lane.b32.xlu0 %v566, 4
        %v930 = vpop.permute.xlu0 %929
        %931 = vrot.lane.b32.xlu0 %v567, 4
        %v932 = vpop.permute.xlu0 %931
        %933 = vrot.lane.b32.xlu0 %v568, 4
        %v934 = vpop.permute.xlu0 %933
        %935 = vrot.lane.b32.xlu0 %v569, 4
        %v936 = vpop.permute.xlu0 %935
        %937 = vrot.lane.b32.xlu0 %v570, 4
        %v938 = vpop.permute.xlu0 %937
        %939 = vrot.lane.b32.xlu0 %v571, 4
        %v940 = vpop.permute.xlu0 %939
        %1005 = vrot.lane.b32.xlu0 %v845, 8
        %v1006 = vpop.permute.xlu0 %1005
        %1007 = vrot.lane.b32.xlu0 %v846, 8
        %v1008 = vpop.permute.xlu0 %1007
        %1009 = vrot.lane.b32.xlu0 %v847, 8
        %v1010 = vpop.permute.xlu0 %1009
        %1011 = vrot.lane.b32.xlu0 %v848, 8
        %v1012 = vpop.permute.xlu0 %1011
        %1013 = vrot.lane.b32.xlu0 %v849, 8
        %v1014 = vpop.permute.xlu0 %1013
        %1015 = vrot.lane.b32.xlu0 %v850, 8
        %v1016 = vpop.permute.xlu0 %1015
        %1017 = vrot.lane.b32.xlu0 %v851, 8
        %v1018 = vpop.permute.xlu0 %1017
        %1019 = vrot.lane.b32.xlu0 %v852, 8
        %v1020 = vpop.permute.xlu0 %1019
        %1021 = vrot.lane.b32.xlu0 %v853, 8
        %v1022 = vpop.permute.xlu0 %1021
        %1023 = vrot.lane.b32.xlu0 %v854, 8
        %v1024 = vpop.permute.xlu0 %1023
        %1025 = vrot.lane.b32.xlu0 %v855, 8
        %v1026 = vpop.permute.xlu0 %1025
        %1027 = vrot.lane.b32.xlu0 %v856, 8
        %v1028 = vpop.permute.xlu0 %1027
        %1029 = vrot.lane.b32.xlu0 %v857, 8
        %v1030 = vpop.permute.xlu0 %1029
        %1031 = vrot.lane.b32.xlu0 %v858, 8
        %v1032 = vpop.permute.xlu0 %1031
        %1033 = vrot.lane.b32.xlu0 %v859, 8
        %v1034 = vpop.permute.xlu0 %1033
        %1035 = vrot.lane.b32.xlu0 %v860, 8
        %v1036 = vpop.permute.xlu0 %1035
        %1037 = vrot.lane.b32.xlu0 %v861, 8
        %v1038 = vpop.permute.xlu0 %1037
        %1039 = vrot.lane.b32.xlu0 %v862, 8
        %v1040 = vpop.permute.xlu0 %1039
        %1041 = vrot.lane.b32.xlu0 %v863, 8
        %v1042 = vpop.permute.xlu0 %1041
        %1043 = vrot.lane.b32.xlu0 %v864, 8
        %v1044 = vpop.permute.xlu0 %1043
        %1045 = vrot.lane.b32.xlu0 %v865, 8
        %v1046 = vpop.permute.xlu0 %1045
        %1047 = vrot.lane.b32.xlu0 %v866, 8
        %v1048 = vpop.permute.xlu0 %1047
        %1049 = vrot.lane.b32.xlu0 %v867, 8
        %v1050 = vpop.permute.xlu0 %1049
        %1051 = vrot.lane.b32.xlu0 %v868, 8
        %v1052 = vpop.permute.xlu0 %1051
        %1053 = vrot.lane.b32.xlu0 %v869, 8
        %v1054 = vpop.permute.xlu0 %1053
        %1055 = vrot.lane.b32.xlu0 %v870, 8
        %v1056 = vpop.permute.xlu0 %1055
        %1057 = vrot.lane.b32.xlu0 %v871, 8
        %v1058 = vpop.permute.xlu0 %1057
        %1059 = vrot.lane.b32.xlu0 %v872, 8
        %v1060 = vpop.permute.xlu0 %1059
        %1061 = vrot.lane.b32.xlu0 %v873, 8
        %v1062 = vpop.permute.xlu0 %1061
        %1063 = vrot.lane.b32.xlu0 %v874, 8
        %v1064 = vpop.permute.xlu0 %1063
        %1065 = vrot.lane.b32.xlu0 %v875, 8
        %v1066 = vpop.permute.xlu0 %1065
        %1067 = vrot.lane.b32.xlu0 %v876, 8
        %v1068 = vpop.permute.xlu0 %1067
        %vm1101 = vcmask 31744
        %v1102 = vsel %vm1101, %v710, %v878
        %v1103 = vsel %vm1101, %v711, %v880
        %v1104 = vsel %vm1101, %v712, %v882
        %v1105 = vsel %vm1101, %v713, %v884
        %v1106 = vsel %vm1101, %v714, %v886
        %v1107 = vsel %vm1101, %v715, %v888
        %v1108 = vsel %vm1101, %v716, %v890
        %v1109 = vsel %vm1101, %v717, %v892
        %v1110 = vsel %vm1101, %v718, %v894
        %v1111 = vsel %vm1101, %v719, %v896
        %v1112 = vsel %vm1101, %v720, %v898
        %v1113 = vsel %vm1101, %v721, %v900
        %v1114 = vsel %vm1101, %v722, %v902
        %v1115 = vsel %vm1101, %v723, %v904
        %v1116 = vsel %vm1101, %v724, %v906
        %v1117 = vsel %vm1101, %v725, %v908
        %v1118 = vsel %vm1101, %v726, %v910
        %v1119 = vsel %vm1101, %v727, %v912
        %v1120 = vsel %vm1101, %v728, %v914
        %v1121 = vsel %vm1101, %v729, %v916
        %v1122 = vsel %vm1101, %v730, %v918
        %v1123 = vsel %vm1101, %v731, %v920
        %v1124 = vsel %vm1101, %v732, %v922
        %v1125 = vsel %vm1101, %v733, %v924
        %v1126 = vsel %vm1101, %v734, %v926
        %v1127 = vsel %vm1101, %v735, %v928
        %v1128 = vsel %vm1101, %v736, %v930
        %v1129 = vsel %vm1101, %v737, %v932
        %v1130 = vsel %vm1101, %v738, %v934
        %v1131 = vsel %vm1101, %v739, %v936
        %v1132 = vsel %vm1101, %v740, %v938
        %v1133 = vsel %vm1101, %v741, %v940
        %vm1134 = vcmask 64512
        %v1135 = vsel %vm1134, %v1102, %v1006
        %v1136 = vsel %vm1134, %v1103, %v1008
        %v1137 = vsel %vm1134, %v1104, %v1010
        %v1138 = vsel %vm1134, %v1105, %v1012
        %v1139 = vsel %vm1134, %v1106, %v1014
        %v1140 = vsel %vm1134, %v1107, %v1016
        %v1141 = vsel %vm1134, %v1108, %v1018
        %v1142 = vsel %vm1134, %v1109, %v1020
        %v1143 = vsel %vm1134, %v1110, %v1022
        %v1144 = vsel %vm1134, %v1111, %v1024
        %v1145 = vsel %vm1134, %v1112, %v1026
        %v1146 = vsel %vm1134, %v1113, %v1028
        %v1147 = vsel %vm1134, %v1114, %v1030
        %v1148 = vsel %vm1134, %v1115, %v1032
        %v1149 = vsel %vm1134, %v1116, %v1034
        %v1150 = vsel %vm1134, %v1117, %v1036
        %v1151 = vsel %vm1134, %v1118, %v1038
        %v1152 = vsel %vm1134, %v1119, %v1040
        %v1153 = vsel %vm1134, %v1120, %v1042
        %v1154 = vsel %vm1134, %v1121, %v1044
        %v1155 = vsel %vm1134, %v1122, %v1046
        %v1156 = vsel %vm1134, %v1123, %v1048
        %v1157 = vsel %vm1134, %v1124, %v1050
        %v1158 = vsel %vm1134, %v1125, %v1052
        %v1159 = vsel %vm1134, %v1126, %v1054
        %v1160 = vsel %vm1134, %v1127, %v1056
        %v1161 = vsel %vm1134, %v1128, %v1058
        %v1162 = vsel %vm1134, %v1129, %v1060
        %v1163 = vsel %vm1134, %v1130, %v1062
        %v1164 = vsel %vm1134, %v1131, %v1064
        %v1165 = vsel %vm1134, %v1132, %v1066
        %v1166 = vsel %vm1134, %v1133, %v1068
        %1199 = vrot.lane.b32.xlu0 %v1135, 12
        %v1200 = vpop.permute.xlu0 %1199
        %1201 = vrot.lane.b32.xlu0 %v1136, 12
        %v1202 = vpop.permute.xlu0 %1201
        %1203 = vrot.lane.b32.xlu0 %v1137, 12
        %v1204 = vpop.permute.xlu0 %1203
        %1205 = vrot.lane.b32.xlu0 %v1138, 12
        %v1206 = vpop.permute.xlu0 %1205
        %1207 = vrot.lane.b32.xlu0 %v1139, 12
        %v1208 = vpop.permute.xlu0 %1207
        %1209 = vrot.lane.b32.xlu0 %v1140, 12
        %v1210 = vpop.permute.xlu0 %1209
        %1211 = vrot.lane.b32.xlu0 %v1141, 12
        %v1212 = vpop.permute.xlu0 %1211
        %1213 = vrot.lane.b32.xlu0 %v1142, 12
        %v1214 = vpop.permute.xlu0 %1213
        %1215 = vrot.lane.b32.xlu0 %v1143, 12
        %v1216 = vpop.permute.xlu0 %1215
        %1217 = vrot.lane.b32.xlu0 %v1144, 12
        %v1218 = vpop.permute.xlu0 %1217
        %1219 = vrot.lane.b32.xlu0 %v1145, 12
        %v1220 = vpop.permute.xlu0 %1219
        %1221 = vrot.lane.b32.xlu0 %v1146, 12
        %v1222 = vpop.permute.xlu0 %1221
        %1223 = vrot.lane.b32.xlu0 %v1147, 12
        %v1224 = vpop.permute.xlu0 %1223
        %1225 = vrot.lane.b32.xlu0 %v1148, 12
        %v1226 = vpop.permute.xlu0 %1225
        %1227 = vrot.lane.b32.xlu0 %v1149, 12
        %v1228 = vpop.permute.xlu0 %1227
        %1229 = vrot.lane.b32.xlu0 %v1150, 12
        %v1230 = vpop.permute.xlu0 %1229
        %1231 = vrot.lane.b32.xlu0 %v1151, 12
        %v1232 = vpop.permute.xlu0 %1231
        %1233 = vrot.lane.b32.xlu0 %v1152, 12
        %v1234 = vpop.permute.xlu0 %1233
        %1235 = vrot.lane.b32.xlu0 %v1153, 12
        %v1236 = vpop.permute.xlu0 %1235
        %1237 = vrot.lane.b32.xlu0 %v1154, 12
        %v1238 = vpop.permute.xlu0 %1237
        %1239 = vrot.lane.b32.xlu0 %v1155, 12
        %v1240 = vpop.permute.xlu0 %1239
        %1241 = vrot.lane.b32.xlu0 %v1156, 12
        %v1242 = vpop.permute.xlu0 %1241
        %1243 = vrot.lane.b32.xlu0 %v1157, 12
        %v1244 = vpop.permute.xlu0 %1243
        %1245 = vrot.lane.b32.xlu0 %v1158, 12
        %v1246 = vpop.permute.xlu0 %1245
        %1247 = vrot.lane.b32.xlu0 %v1159, 12
        %v1248 = vpop.permute.xlu0 %1247
        %1249 = vrot.lane.b32.xlu0 %v1160, 12
        %v1250 = vpop.permute.xlu0 %1249
        %1251 = vrot.lane.b32.xlu0 %v1161, 12
        %v1252 = vpop.permute.xlu0 %1251
        %1253 = vrot.lane.b32.xlu0 %v1162, 12
        %v1254 = vpop.permute.xlu0 %1253
        %1255 = vrot.lane.b32.xlu0 %v1163, 12
        %v1256 = vpop.permute.xlu0 %1255
        %1257 = vrot.lane.b32.xlu0 %v1164, 12
        %v1258 = vpop.permute.xlu0 %1257
        %1259 = vrot.lane.b32.xlu0 %v1165, 12
        %v1260 = vpop.permute.xlu0 %1259
        %1261 = vrot.lane.b32.xlu0 %v1166, 12
        %v1262 = vpop.permute.xlu0 %1261
        %1296 = vrot.lane.b32.xlu0 %v1137, 24
        %v1297 = vpop.permute.xlu0 %1296
        %1298 = vrot.lane.b32.xlu0 %v1138, 24
        %v1299 = vpop.permute.xlu0 %1298
        %1300 = vrot.lane.b32.xlu0 %v1139, 24
        %v1301 = vpop.permute.xlu0 %1300
        %1302 = vrot.lane.b32.xlu0 %v1140, 24
        %v1303 = vpop.permute.xlu0 %1302
        %1304 = vrot.lane.b32.xlu0 %v1141, 24
        %v1305 = vpop.permute.xlu0 %1304
        %1306 = vrot.lane.b32.xlu0 %v1142, 24
        %v1307 = vpop.permute.xlu0 %1306
        %1308 = vrot.lane.b32.xlu0 %v1143, 24
        %v1309 = vpop.permute.xlu0 %1308
        %1310 = vrot.lane.b32.xlu0 %v1144, 24
        %v1311 = vpop.permute.xlu0 %1310
        %1312 = vrot.lane.b32.xlu0 %v1145, 24
        %v1313 = vpop.permute.xlu0 %1312
        %1314 = vrot.lane.b32.xlu0 %v1146, 24
        %v1315 = vpop.permute.xlu0 %1314
        %1316 = vrot.lane.b32.xlu0 %v1147, 24
        %v1317 = vpop.permute.xlu0 %1316
        %1318 = vrot.lane.b32.xlu0 %v1148, 24
        %v1319 = vpop.permute.xlu0 %1318
        %1320 = vrot.lane.b32.xlu0 %v1149, 24
        %v1321 = vpop.permute.xlu0 %1320
        %1322 = vrot.lane.b32.xlu0 %v1150, 24
        %v1323 = vpop.permute.xlu0 %1322
        %1324 = vrot.lane.b32.xlu0 %v1151, 24
        %v1325 = vpop.permute.xlu0 %1324
        %1326 = vrot.lane.b32.xlu0 %v1152, 24
        %v1327 = vpop.permute.xlu0 %1326
        %1328 = vrot.lane.b32.xlu0 %v1153, 24
        %v1329 = vpop.permute.xlu0 %1328
        %1330 = vrot.lane.b32.xlu0 %v1154, 24
        %v1331 = vpop.permute.xlu0 %1330
        %1332 = vrot.lane.b32.xlu0 %v1155, 24
        %v1333 = vpop.permute.xlu0 %1332
        %1334 = vrot.lane.b32.xlu0 %v1156, 24
        %v1335 = vpop.permute.xlu0 %1334
        %1336 = vrot.lane.b32.xlu0 %v1157, 24
        %v1337 = vpop.permute.xlu0 %1336
        %1338 = vrot.lane.b32.xlu0 %v1158, 24
        %v1339 = vpop.permute.xlu0 %1338
        %1340 = vrot.lane.b32.xlu0 %v1159, 24
        %v1341 = vpop.permute.xlu0 %1340
        %1342 = vrot.lane.b32.xlu0 %v1160, 24
        %v1343 = vpop.permute.xlu0 %1342
        %1344 = vrot.lane.b32.xlu0 %v1161, 24
        %v1345 = vpop.permute.xlu0 %1344
        %1346 = vrot.lane.b32.xlu0 %v1162, 24
        %v1347 = vpop.permute.xlu0 %1346
        %1348 = vrot.lane.b32.xlu0 %v1163, 24
        %v1349 = vpop.permute.xlu0 %1348
        %1350 = vrot.lane.b32.xlu0 %v1164, 24
        %v1351 = vpop.permute.xlu0 %1350
        %1352 = vrot.lane.b32.xlu0 %v1165, 24
        %v1353 = vpop.permute.xlu0 %1352
        %1354 = vrot.lane.b32.xlu0 %v1166, 24
        %v1355 = vpop.permute.xlu0 %1354
        %1356 = vrot.lane.b32.xlu0 0.0, 24
        %v1357 = vpop.permute.xlu0 %1356
        %vm1389 = vcmask 97280
        %v1390 = vsel %vm1389, 0.0, %v1200
        %v1391 = vsel %vm1389, 0.0, %v1202
        %v1392 = vsel %vm1389, %v1135, %v1204
        %v1393 = vsel %vm1389, %v1136, %v1206
        %v1394 = vsel %vm1389, %v1137, %v1208
        %v1395 = vsel %vm1389, %v1138, %v1210
        %v1396 = vsel %vm1389, %v1139, %v1212
        %v1397 = vsel %vm1389, %v1140, %v1214
        %v1398 = vsel %vm1389, %v1141, %v1216
        %v1399 = vsel %vm1389, %v1142, %v1218
        %v1400 = vsel %vm1389, %v1143, %v1220
        %v1401 = vsel %vm1389, %v1144, %v1222
        %v1402 = vsel %vm1389, %v1145, %v1224
        %v1403 = vsel %vm1389, %v1146, %v1226
        %v1404 = vsel %vm1389, %v1147, %v1228
        %v1405 = vsel %vm1389, %v1148, %v1230
        %v1406 = vsel %vm1389, %v1149, %v1232
        %v1407 = vsel %vm1389, %v1150, %v1234
        %v1408 = vsel %vm1389, %v1151, %v1236
        %v1409 = vsel %vm1389, %v1152, %v1238
        %v1410 = vsel %vm1389, %v1153, %v1240
        %v1411 = vsel %vm1389, %v1154, %v1242
        %v1412 = vsel %vm1389, %v1155, %v1244
        %v1413 = vsel %vm1389, %v1156, %v1246
        %v1414 = vsel %vm1389, %v1157, %v1248
        %v1415 = vsel %vm1389, %v1158, %v1250
        %v1416 = vsel %vm1389, %v1159, %v1252
        %v1417 = vsel %vm1389, %v1160, %v1254
        %v1418 = vsel %vm1389, %v1161, %v1256
        %v1419 = vsel %vm1389, %v1162, %v1258
        %v1420 = vsel %vm1389, %v1163, %v1260
        %v1421 = vsel %vm1389, %v1164, %v1262
        %vm1422 = vcmask 195584
        %v1423 = vsel %vm1422, %v1390, %v1297
        %v1424 = vsel %vm1422, %v1391, %v1299
        %v1425 = vsel %vm1422, %v1392, %v1301
        %v1426 = vsel %vm1422, %v1393, %v1303
        %v1427 = vsel %vm1422, %v1394, %v1305
        %v1428 = vsel %vm1422, %v1395, %v1307
        %v1429 = vsel %vm1422, %v1396, %v1309
        %v1430 = vsel %vm1422, %v1397, %v1311
        %v1431 = vsel %vm1422, %v1398, %v1313
        %v1432 = vsel %vm1422, %v1399, %v1315
        %v1433 = vsel %vm1422, %v1400, %v1317
        %v1434 = vsel %vm1422, %v1401, %v1319
        %v1435 = vsel %vm1422, %v1402, %v1321
        %v1436 = vsel %vm1422, %v1403, %v1323
        %v1437 = vsel %vm1422, %v1404, %v1325
        %v1438 = vsel %vm1422, %v1405, %v1327
        %v1439 = vsel %vm1422, %v1406, %v1329
        %v1440 = vsel %vm1422, %v1407, %v1331
        %v1441 = vsel %vm1422, %v1408, %v1333
        %v1442 = vsel %vm1422, %v1409, %v1335
        %v1443 = vsel %vm1422, %v1410, %v1337
        %v1444 = vsel %vm1422, %v1411, %v1339
        %v1445 = vsel %vm1422, %v1412, %v1341
        %v1446 = vsel %vm1422, %v1413, %v1343
        %v1447 = vsel %vm1422, %v1414, %v1345
        %v1448 = vsel %vm1422, %v1415, %v1347
        %v1449 = vsel %vm1422, %v1416, %v1349
        %v1450 = vsel %vm1422, %v1417, %v1351
        %v1451 = vsel %vm1422, %v1418, %v1353
        %v1452 = vsel %vm1422, %v1419, %v1355
        %v1453 = vsel %vm1422, %v1420, %v1357
        %v1454 = vsel %vm1422, %v1421, %v1357
        %v1455 = vpack.c.bf16 %v1424, %v1423
        %v1456 = vpack.c.bf16 %v1426, %v1425
        %v1457 = vpack.c.bf16 %v1428, %v1427
        %v1458 = vpack.c.bf16 %v1430, %v1429
        %v1459 = vpack.c.bf16 %v1432, %v1431
        %v1460 = vpack.c.bf16 %v1434, %v1433
        %v1461 = vpack.c.bf16 %v1436, %v1435
        %v1462 = vpack.c.bf16 %v1438, %v1437
        %v1463 = vpack.c.bf16 %v1440, %v1439
        %v1464 = vpack.c.bf16 %v1442, %v1441
        %v1465 = vpack.c.bf16 %v1444, %v1443
        %v1466 = vpack.c.bf16 %v1446, %v1445
        %v1467 = vpack.c.bf16 %v1448, %v1447
        %v1468 = vpack.c.bf16 %v1450, %v1449
        %v1469 = vpack.c.bf16 %v1452, %v1451
        %v1470 = vpack.c.bf16 %v1454, %v1453
        %v1471 = vld [vmem:[%s3] sm:$0xf]
        %v1472 = vld [vmem:[%s3 + $0x4] sm:$0xf]
        %v1473 = vld [vmem:[%s3 + $0x8] sm:$0xf]
        %v1474 = vld [vmem:[%s3 + $0xc] sm:$0xf]
        %v1475 = vld [vmem:[%s3 + $0x10] sm:$0x3]
        %v1476 = vld [vmem:[%s4] sm:$0x1]
        %v1478 = vperm.slane %v1476, 0
        %v1485 = vunpack.c.l.b16 %v1471
        %v1486 = vunpack.c.l.b16 %v1472
        %v1487 = vunpack.c.l.b16 %v1473
        %v1488 = vunpack.c.l.b16 %v1474
        %v1489 = vunpack.c.l.b16 %v1475
        %v1490 = vpack.c.b16 %v1486, %v1485
        %v1491 = vpack.c.b16 %v1488, %v1487
        %v1492 = vpack.c.b16 %v1489, %v1489
        %vm1495 = vcmask 293888
        %v1497 = vsel %vm1495, %v1455, 0
        %v1500 = vsel %vm1495, %v1456, 0
        %v1503 = vsel %vm1495, %v1457, 0
        %v1506 = vsel %vm1495, %v1458, 0
        %v1509 = vsel %vm1495, %v1459, 0
        %v1512 = vsel %vm1495, %v1460, 0
        %v1515 = vsel %vm1495, %v1461, 0
        %v1518 = vsel %vm1495, %v1462, 0
        %v1521 = vsel %vm1495, %v1463, 0
        %v1524 = vsel %vm1495, %v1464, 0
        %v1527 = vsel %vm1495, %v1465, 0
        %v1530 = vsel %vm1495, %v1466, 0
        %v1533 = vsel %vm1495, %v1467, 0
        %v1536 = vsel %vm1495, %v1468, 0
        %v1539 = vsel %vm1495, %v1469, 0
        %v1542 = vsel %vm1495, %v1470, 0
        %vm1544 = vcmask 1041408
        %v1546 = vsel %vm1544, %v1492, 0
        %1548 = vmatpush.bf16.msra.mxu0 0
        %1549 = vmatpush.bf16.msra.mxu0 0
        %1550 = vmatpush.bf16.msra.mxu0 0
        %1551 = vmatpush.bf16.msra.mxu0 0
        %1552 = vmatpush.bf16.msra.mxu0 0
        %1553 = vmatpush.bf16.msra.mxu0 %v1546
        %1554 = vmatpush.bf16.msra.mxu0 %v1491
        %1555 = vmatpush.bf16.msra.mxu0 %v1490
        %1556 = vmatmul.bf16.gmra.mxu0 %v1497
        %v1557 = vpop.f32.mrf.mxu0
        %v1558 = vadd.f32 %v1478, %v1557
        %v1559 = vpop.f32.mrf.mxu0
        %v1560 = vadd.f32 %v1478, %v1559
        %1561 = vmatmul.bf16.gmra.mxu0 %v1500
        %v1562 = vpop.f32.mrf.mxu0
        %v1563 = vadd.f32 %v1478, %v1562
        %v1564 = vpop.f32.mrf.mxu0
        %v1565 = vadd.f32 %v1478, %v1564
        %1566 = vmatmul.bf16.gmra.mxu0 %v1503
        %v1567 = vpop.f32.mrf.mxu0
        %v1568 = vadd.f32 %v1478, %v1567
        %v1569 = vpop.f32.mrf.mxu0
        %v1570 = vadd.f32 %v1478, %v1569
        %1571 = vmatmul.bf16.gmra.mxu0 %v1506
        %v1572 = vpop.f32.mrf.mxu0
        %v1573 = vadd.f32 %v1478, %v1572
        %v1574 = vpop.f32.mrf.mxu0
        %v1575 = vadd.f32 %v1478, %v1574
        %1576 = vmatmul.bf16.gmra.mxu0 %v1509
        %v1577 = vpop.f32.mrf.mxu0
        %v1578 = vadd.f32 %v1478, %v1577
        %v1579 = vpop.f32.mrf.mxu0
        %v1580 = vadd.f32 %v1478, %v1579
        %1581 = vmatmul.bf16.gmra.mxu0 %v1512
        %v1582 = vpop.f32.mrf.mxu0
        %v1583 = vadd.f32 %v1478, %v1582
        %v1584 = vpop.f32.mrf.mxu0
        %v1585 = vadd.f32 %v1478, %v1584
        %1586 = vmatmul.bf16.gmra.mxu0 %v1515
        %v1587 = vpop.f32.mrf.mxu0
        %v1588 = vadd.f32 %v1478, %v1587
        %v1589 = vpop.f32.mrf.mxu0
        %v1590 = vadd.f32 %v1478, %v1589
        %1591 = vmatmul.bf16.gmra.mxu0 %v1518
        %v1592 = vpop.f32.mrf.mxu0
        %v1593 = vadd.f32 %v1478, %v1592
        %v1594 = vpop.f32.mrf.mxu0
        %v1595 = vadd.f32 %v1478, %v1594
        %1596 = vmatmul.bf16.gmra.mxu0 %v1521
        %v1597 = vpop.f32.mrf.mxu0
        %v1598 = vadd.f32 %v1478, %v1597
        %v1599 = vpop.f32.mrf.mxu0
        %v1600 = vadd.f32 %v1478, %v1599
        %1601 = vmatmul.bf16.gmra.mxu0 %v1524
        %v1602 = vpop.f32.mrf.mxu0
        %v1603 = vadd.f32 %v1478, %v1602
        %v1604 = vpop.f32.mrf.mxu0
        %v1605 = vadd.f32 %v1478, %v1604
        %1606 = vmatmul.bf16.gmra.mxu0 %v1527
        %v1607 = vpop.f32.mrf.mxu0
        %v1608 = vadd.f32 %v1478, %v1607
        %v1609 = vpop.f32.mrf.mxu0
        %v1610 = vadd.f32 %v1478, %v1609
        %1611 = vmatmul.bf16.gmra.mxu0 %v1530
        %v1612 = vpop.f32.mrf.mxu0
        %v1613 = vadd.f32 %v1478, %v1612
        %v1614 = vpop.f32.mrf.mxu0
        %v1615 = vadd.f32 %v1478, %v1614
        %1616 = vmatmul.bf16.gmra.mxu0 %v1533
        %v1617 = vpop.f32.mrf.mxu0
        %v1618 = vadd.f32 %v1478, %v1617
        %v1619 = vpop.f32.mrf.mxu0
        %v1620 = vadd.f32 %v1478, %v1619
        %1621 = vmatmul.bf16.gmra.mxu0 %v1536
        %v1622 = vpop.f32.mrf.mxu0
        %v1623 = vadd.f32 %v1478, %v1622
        %v1624 = vpop.f32.mrf.mxu0
        %v1625 = vadd.f32 %v1478, %v1624
        %1626 = vmatmul.bf16.gmra.mxu0 %v1539
        %v1627 = vpop.f32.mrf.mxu0
        %v1628 = vadd.f32 %v1478, %v1627
        %v1629 = vpop.f32.mrf.mxu0
        %v1630 = vadd.f32 %v1478, %v1629
        %1631 = vmatmul.bf16.gmra.mxu0 %v1542
        %v1632 = vpop.f32.mrf.mxu0
        %v1633 = vadd.f32 %v1478, %v1632
        %v1634 = vpop.f32.mrf.mxu0
        %v1635 = vadd.f32 %v1478, %v1634
        %1636 = vdwg.mxu0
        %v1637 = vmax.f32 %v1558, 0.0
        %v1638 = vmax.f32 %v1560, 0.0
        %v1639 = vmax.f32 %v1563, 0.0
        %v1640 = vmax.f32 %v1565, 0.0
        %v1641 = vmax.f32 %v1568, 0.0
        %v1642 = vmax.f32 %v1570, 0.0
        %v1643 = vmax.f32 %v1573, 0.0
        %v1644 = vmax.f32 %v1575, 0.0
        %v1645 = vmax.f32 %v1578, 0.0
        %v1646 = vmax.f32 %v1580, 0.0
        %v1647 = vmax.f32 %v1583, 0.0
        %v1648 = vmax.f32 %v1585, 0.0
        %v1649 = vmax.f32 %v1588, 0.0
        %v1650 = vmax.f32 %v1590, 0.0
        %v1651 = vmax.f32 %v1593, 0.0
        %v1652 = vmax.f32 %v1595, 0.0
        %v1653 = vmax.f32 %v1598, 0.0
        %v1654 = vmax.f32 %v1600, 0.0
        %v1655 = vmax.f32 %v1603, 0.0
        %v1656 = vmax.f32 %v1605, 0.0
        %v1657 = vmax.f32 %v1608, 0.0
        %v1658 = vmax.f32 %v1610, 0.0
        %v1659 = vmax.f32 %v1613, 0.0
        %v1660 = vmax.f32 %v1615, 0.0
        %v1661 = vmax.f32 %v1618, 0.0
        %v1662 = vmax.f32 %v1620, 0.0
        %v1663 = vmax.f32 %v1623, 0.0
        %v1664 = vmax.f32 %v1625, 0.0
        %v1665 = vmax.f32 %v1628, 0.0
        %v1666 = vmax.f32 %v1630, 0.0
        %v1667 = vmax.f32 %v1633, 0.0
        %v1668 = vmax.f32 %v1635, 0.0
        %v1669 = vpack.c.bf16 %v1638, %v1637
        %v1670 = vpack.c.bf16 %v1640, %v1639
        %v1671 = vpack.c.bf16 %v1642, %v1641
        %v1672 = vpack.c.bf16 %v1644, %v1643
        %v1673 = vpack.c.bf16 %v1646, %v1645
        %v1674 = vpack.c.bf16 %v1648, %v1647
        %v1675 = vpack.c.bf16 %v1650, %v1649
        %v1676 = vpack.c.bf16 %v1652, %v1651
        %v1677 = vpack.c.bf16 %v1654, %v1653
        %v1678 = vpack.c.bf16 %v1656, %v1655
        %v1679 = vpack.c.bf16 %v1658, %v1657
        %v1680 = vpack.c.bf16 %v1660, %v1659
        %v1681 = vpack.c.bf16 %v1662, %v1661
        %v1682 = vpack.c.bf16 %v1664, %v1663
        %v1683 = vpack.c.bf16 %v1666, %v1665
        %v1684 = vpack.c.bf16 %v1668, %v1667
        %v1685 = vld [vmem:[%s5] sm:$0x3]
        %v1686 = vld [vmem:[%s6] sm:$0x1]
        %v1688 = vperm.slane %v1686, 0
        %v1691 = vsel %vm1101, %v1669, 0
        %v1694 = vsel %vm1101, %v1670, 0
        %v1697 = vsel %vm1101, %v1671, 0
        %v1700 = vsel %vm1101, %v1672, 0
        %v1703 = vsel %vm1101, %v1673, 0
        %v1706 = vsel %vm1101, %v1674, 0
        %v1709 = vsel %vm1101, %v1675, 0
        %v1712 = vsel %vm1101, %v1676, 0
        %v1715 = vsel %vm1101, %v1677, 0
        %v1718 = vsel %vm1101, %v1678, 0
        %v1721 = vsel %vm1101, %v1679, 0
        %v1724 = vsel %vm1101, %v1680, 0
        %v1727 = vsel %vm1101, %v1681, 0
        %v1730 = vsel %vm1101, %v1682, 0
        %v1733 = vsel %vm1101, %v1683, 0
        %v1736 = vsel %vm1101, %v1684, 0
        %v1739 = vsel %vm1544, %v1685, 0
        %1741 = vmatpush.bf16.msra.mxu0 0
        %1742 = vmatpush.bf16.msra.mxu0 0
        %1743 = vmatpush.bf16.msra.mxu0 0
        %1744 = vmatpush.bf16.msra.mxu0 0
        %1745 = vmatpush.bf16.msra.mxu0 0
        %1746 = vmatpush.bf16.msra.mxu0 0
        %1747 = vmatpush.bf16.msra.mxu0 0
        %1748 = vmatpush.bf16.msra.mxu0 %v1739
        %1749 = vmatmul.bf16.gmra.mxu0 %v1691
        %v1750 = vpop.f32.mrf.mxu0
        %v1751 = vadd.f32 %v1688, %v1750
        %v1752 = vpop.f32.mrf.mxu0
        %v1753 = vadd.f32 %v1688, %v1752
        %1754 = vmatmul.bf16.gmra.mxu0 %v1694
        %v1755 = vpop.f32.mrf.mxu0
        %v1756 = vadd.f32 %v1688, %v1755
        %v1757 = vpop.f32.mrf.mxu0
        %v1758 = vadd.f32 %v1688, %v1757
        %1759 = vmatmul.bf16.gmra.mxu0 %v1697
        %v1760 = vpop.f32.mrf.mxu0
        %v1761 = vadd.f32 %v1688, %v1760
        %v1762 = vpop.f32.mrf.mxu0
        %v1763 = vadd.f32 %v1688, %v1762
        %1764 = vmatmul.bf16.gmra.mxu0 %v1700
        %v1765 = vpop.f32.mrf.mxu0
        %v1766 = vadd.f32 %v1688, %v1765
        %v1767 = vpop.f32.mrf.mxu0
        %v1768 = vadd.f32 %v1688, %v1767
        %1769 = vmatmul.bf16.gmra.mxu0 %v1703
        %v1770 = vpop.f32.mrf.mxu0
        %v1771 = vadd.f32 %v1688, %v1770
        %v1772 = vpop.f32.mrf.mxu0
        %v1773 = vadd.f32 %v1688, %v1772
        %1774 = vmatmul.bf16.gmra.mxu0 %v1706
        %v1775 = vpop.f32.mrf.mxu0
        %v1776 = vadd.f32 %v1688, %v1775
        %v1777 = vpop.f32.mrf.mxu0
        %v1778 = vadd.f32 %v1688, %v1777
        %1779 = vmatmul.bf16.gmra.mxu0 %v1709
        %v1780 = vpop.f32.mrf.mxu0
        %v1781 = vadd.f32 %v1688, %v1780
        %v1782 = vpop.f32.mrf.mxu0
        %v1783 = vadd.f32 %v1688, %v1782
        %1784 = vmatmul.bf16.gmra.mxu0 %v1712
        %v1785 = vpop.f32.mrf.mxu0
        %v1786 = vadd.f32 %v1688, %v1785
        %v1787 = vpop.f32.mrf.mxu0
        %v1788 = vadd.f32 %v1688, %v1787
        %1789 = vmatmul.bf16.gmra.mxu0 %v1715
        %v1790 = vpop.f32.mrf.mxu0
        %v1791 = vadd.f32 %v1688, %v1790
        %v1792 = vpop.f32.mrf.mxu0
        %v1793 = vadd.f32 %v1688, %v1792
        %1794 = vmatmul.bf16.gmra.mxu0 %v1718
        %v1795 = vpop.f32.mrf.mxu0
        %v1796 = vadd.f32 %v1688, %v1795
        %v1797 = vpop.f32.mrf.mxu0
        %v1798 = vadd.f32 %v1688, %v1797
        %1799 = vmatmul.bf16.gmra.mxu0 %v1721
        %v1800 = vpop.f32.mrf.mxu0
        %v1801 = vadd.f32 %v1688, %v1800
        %v1802 = vpop.f32.mrf.mxu0
        %v1803 = vadd.f32 %v1688, %v1802
        %1804 = vmatmul.bf16.gmra.mxu0 %v1724
        %v1805 = vpop.f32.mrf.mxu0
        %v1806 = vadd.f32 %v1688, %v1805
        %v1807 = vpop.f32.mrf.mxu0
        %v1808 = vadd.f32 %v1688, %v1807
        %1809 = vmatmul.bf16.gmra.mxu0 %v1727
        %v1810 = vpop.f32.mrf.mxu0
        %v1811 = vadd.f32 %v1688, %v1810
        %v1812 = vpop.f32.mrf.mxu0
        %v1813 = vadd.f32 %v1688, %v1812
        %1814 = vmatmul.bf16.gmra.mxu0 %v1730
        %v1815 = vpop.f32.mrf.mxu0
        %v1816 = vadd.f32 %v1688, %v1815
        %v1817 = vpop.f32.mrf.mxu0
        %v1818 = vadd.f32 %v1688, %v1817
        %1819 = vmatmul.bf16.gmra.mxu0 %v1733
        %v1820 = vpop.f32.mrf.mxu0
        %v1821 = vadd.f32 %v1688, %v1820
        %v1822 = vpop.f32.mrf.mxu0
        %v1823 = vadd.f32 %v1688, %v1822
        %1824 = vmatmul.bf16.gmra.mxu0 %v1736
        %v1825 = vpop.f32.mrf.mxu0
        %v1826 = vadd.f32 %v1688, %v1825
        %v1827 = vpop.f32.mrf.mxu0
        %v1828 = vadd.f32 %v1688, %v1827
        %1829 = vdwg.mxu0
        %v1830 = vunpack.c.l.bf16 %v278
        %v1831 = vunpack.c.l.bf16 %v279
        %v1832 = vunpack.c.l.bf16 %v280
        %v1833 = vunpack.c.l.bf16 %v281
        %v1834 = vunpack.c.l.bf16 %v282
        %v1835 = vunpack.c.l.bf16 %v283
        %v1836 = vunpack.c.l.bf16 %v284
        %v1837 = vunpack.c.l.bf16 %v285
        %v1838 = vunpack.c.l.bf16 %v286
        %v1839 = vunpack.c.l.bf16 %v287
        %v1840 = vunpack.c.l.bf16 %v288
        %v1841 = vunpack.c.l.bf16 %v289
        %v1842 = vunpack.c.l.bf16 %v290
        %v1843 = vunpack.c.l.bf16 %v291
        %v1844 = vunpack.c.l.bf16 %v292
        %v1845 = vunpack.c.l.bf16 %v293
        %v1846 = vunpack.c.l.bf16 %v294
        %v1847 = vunpack.c.l.bf16 %v295
        %v1848 = vunpack.c.l.bf16 %v296
        %v1849 = vunpack.c.l.bf16 %v297
        %v1850 = vunpack.c.l.bf16 %v298
        %v1851 = vunpack.c.l.bf16 %v299
        %v1852 = vunpack.c.l.bf16 %v300
        %v1853 = vunpack.c.l.bf16 %v301
        %v1854 = vunpack.c.l.bf16 %v302
        %v1855 = vunpack.c.l.bf16 %v303
        %v1856 = vunpack.c.l.bf16 %v304
        %v1857 = vunpack.c.l.bf16 %v305
        %v1858 = vunpack.c.l.bf16 %v306
        %v1859 = vunpack.c.l.bf16 %v307
        %v1860 = vunpack.c.l.bf16 %v308
        %v1861 = vunpack.c.l.bf16 %v309
        %v1862 = vadd.f32 %v1751, %v1830
        %v1863 = vadd.f32 %v1753, %v1831
        %v1864 = vadd.f32 %v1756, %v1832
        %v1865 = vadd.f32 %v1758, %v1833
        %v1866 = vadd.f32 %v1761, %v1834
        %v1867 = vadd.f32 %v1763, %v1835
        %v1868 = vadd.f32 %v1766, %v1836
        %v1869 = vadd.f32 %v1768, %v1837
        %v1870 = vadd.f32 %v1771, %v1838
        %v1871 = vadd.f32 %v1773, %v1839
        %v1872 = vadd.f32 %v1776, %v1840
        %v1873 = vadd.f32 %v1778, %v1841
        %v1874 = vadd.f32 %v1781, %v1842
        %v1875 = vadd.f32 %v1783, %v1843
        %v1876 = vadd.f32 %v1786, %v1844
        %v1877 = vadd.f32 %v1788, %v1845
        %v1878 = vadd.f32 %v1791, %v1846
        %v1879 = vadd.f32 %v1793, %v1847
        %v1880 = vadd.f32 %v1796, %v1848
        %v1881 = vadd.f32 %v1798, %v1849
        %v1882 = vadd.f32 %v1801, %v1850
        %v1883 = vadd.f32 %v1803, %v1851
        %v1884 = vadd.f32 %v1806, %v1852
        %v1885 = vadd.f32 %v1808, %v1853
        %v1886 = vadd.f32 %v1811, %v1854
        %v1887 = vadd.f32 %v1813, %v1855
        %v1888 = vadd.f32 %v1816, %v1856
        %v1889 = vadd.f32 %v1818, %v1857
        %v1890 = vadd.f32 %v1821, %v1858
        %v1891 = vadd.f32 %v1823, %v1859
        %v1892 = vadd.f32 %v1826, %v1860
        %v1893 = vadd.f32 %v1828, %v1861
        %v1894 = vmax.f32 %v1862, 0.0
        %v1895 = vmax.f32 %v1863, 0.0
        %v1896 = vmax.f32 %v1864, 0.0
        %v1897 = vmax.f32 %v1865, 0.0
        %v1898 = vmax.f32 %v1866, 0.0
        %v1899 = vmax.f32 %v1867, 0.0
        %v1900 = vmax.f32 %v1868, 0.0
        %v1901 = vmax.f32 %v1869, 0.0
        %v1902 = vmax.f32 %v1870, 0.0
        %v1903 = vmax.f32 %v1871, 0.0
        %v1904 = vmax.f32 %v1872, 0.0
        %v1905 = vmax.f32 %v1873, 0.0
        %v1906 = vmax.f32 %v1874, 0.0
        %v1907 = vmax.f32 %v1875, 0.0
        %v1908 = vmax.f32 %v1876, 0.0
        %v1909 = vmax.f32 %v1877, 0.0
        %v1910 = vmax.f32 %v1878, 0.0
        %v1911 = vmax.f32 %v1879, 0.0
        %v1912 = vmax.f32 %v1880, 0.0
        %v1913 = vmax.f32 %v1881, 0.0
        %v1914 = vmax.f32 %v1882, 0.0
        %v1915 = vmax.f32 %v1883, 0.0
        %v1916 = vmax.f32 %v1884, 0.0
        %v1917 = vmax.f32 %v1885, 0.0
        %v1918 = vmax.f32 %v1886, 0.0
        %v1919 = vmax.f32 %v1887, 0.0
        %v1920 = vmax.f32 %v1888, 0.0
        %v1921 = vmax.f32 %v1889, 0.0
        %v1922 = vmax.f32 %v1890, 0.0
        %v1923 = vmax.f32 %v1891, 0.0
        %v1924 = vmax.f32 %v1892, 0.0
        %v1925 = vmax.f32 %v1893, 0.0
        %1926 = vst.msk [vmem:[%s271] sm:$0xff] %vm402, %v1894
        %1927 = vst.msk [vmem:[%s271 + $0x8] sm:$0xff] %vm402, %v1895
        %1928 = vst.msk [vmem:[%s271 + $0x10] sm:$0xff] %vm402, %v1896
        %1929 = vst.msk [vmem:[%s271 + $0x18] sm:$0xff] %vm402, %v1897
        %1930 = vst.msk [vmem:[%s271 + $0x20] sm:$0xff] %vm402, %v1898
        %1931 = vst.msk [vmem:[%s271 + $0x28] sm:$0xff] %vm402, %v1899
        %1932 = vst.msk [vmem:[%s271 + $0x30] sm:$0xff] %vm402, %v1900
        %1933 = vst.msk [vmem:[%s271 + $0x38] sm:$0xff] %vm402, %v1901
        %1934 = vst.msk [vmem:[%s271 + $0x40] sm:$0xff] %vm402, %v1902
        %1935 = vst.msk [vmem:[%s271 + $0x48] sm:$0xff] %vm402, %v1903
        %1936 = vst.msk [vmem:[%s271 + $0x50] sm:$0xff] %vm402, %v1904
        %1937 = vst.msk [vmem:[%s271 + $0x58] sm:$0xff] %vm402, %v1905
        %1938 = vst.msk [vmem:[%s271 + $0x60] sm:$0xff] %vm402, %v1906
        %1939 = vst.msk [vmem:[%s271 + $0x68] sm:$0xff] %vm402, %v1907
        %1940 = vst.msk [vmem:[%s271 + $0x70] sm:$0xff] %vm402, %v1908
        %1941 = vst.msk [vmem:[%s271 + $0x78] sm:$0xff] %vm402, %v1909
        %1942 = vst.msk [vmem:[%s271 + $0x80] sm:$0xff] %vm402, %v1910
        %1943 = vst.msk [vmem:[%s271 + $0x88] sm:$0xff] %vm402, %v1911
        %1944 = vst.msk [vmem:[%s271 + $0x90] sm:$0xff] %vm402, %v1912
        %1945 = vst.msk [vmem:[%s271 + $0x98] sm:$0xff] %vm402, %v1913
        %1946 = vst.msk [vmem:[%s271 + $0xa0] sm:$0xff] %vm402, %v1914
        %1947 = vst.msk [vmem:[%s271 + $0xa8] sm:$0xff] %vm402, %v1915
        %1948 = vst.msk [vmem:[%s271 + $0xb0] sm:$0xff] %vm402, %v1916
        %1949 = vst.msk [vmem:[%s271 + $0xb8] sm:$0xff] %vm402, %v1917
        %1950 = vst.msk [vmem:[%s271 + $0xc0] sm:$0xff] %vm402, %v1918
        %1951 = vst.msk [vmem:[%s271 + $0xc8] sm:$0xff] %vm402, %v1919
        %1952 = vst.msk [vmem:[%s271 + $0xd0] sm:$0xff] %vm402, %v1920
        %1953 = vst.msk [vmem:[%s271 + $0xd8] sm:$0xff] %vm402, %v1921
        %1954 = vst.msk [vmem:[%s271 + $0xe0] sm:$0xff] %vm402, %v1922
        %1955 = vst.msk [vmem:[%s271 + $0xe8] sm:$0xff] %vm402, %v1923
        %1956 = vst.msk [vmem:[%s271 + $0xf0] sm:$0xff] %vm402, %v1924
        %1957 = vst.msk [vmem:[%s271 + $0xf8] sm:$0xff] %vm402, %v1925
        %s1958 = sand.u32 %s181, 1
        %s1959 = scalar_lea.sflag [#allocation3], %s1958
        %s1960 = sand.u32 %s181, 1
        %s1961 = smul.addr %s1960, 256
        %s1962 = scalar_lea.vmem [#allocation2], %s1961
        // Predicated region
        $region49: #{bottleneck_forward_nhwc.1} parent=47 // pred_check
          %p1963 = pneg %p191
        $region50: #{bottleneck_forward_nhwc.1} parent=47 // pred_check_branch
          %1965 = sbr.rel (%p1963) target = $region52
        $region51: #{bottleneck_forward_nhwc.1} parent=47 // pred_region
          %1967 = vsyncadd %s1959, 0
          %s1968 = smul.addr %s21, 32
          %s1969 = smul.addr %s1968, 8
          %s1970 = scalar_lea.hbm %s7, %s1969
          %s1971 = sshll.u32 %s1962, 4
          %s1972 = int_to_ptr.vmem [resolvable:$true] %s1971
          %s1973 = sshll.u32 %s1970, 4
          %s1974 = int_to_ptr.hbm [resolvable:$true] %s1973
          %1979 = dma.vmem_to_hbm [thread:$0]  %s1972, 4096, %s1974, %s1959, 128, 128, 8
        $region52: #{bottleneck_forward_nhwc.1} parent=47 // pred_fallthru
          _
      $region48: #{bottleneck_forward_nhwc.1} parent=5 // pred_fallthru
        _
      %p1980 = scmp.le.s32.totalorder 2, %s16
      // Predicated region
      $region53: #{bottleneck_forward_nhwc.1} parent=5 // pred_check
        %p1981 = pneg %p1980
      $region54: #{bottleneck_forward_nhwc.1} parent=5 // pred_check_branch
        %1983 = sbr.rel (%p1981) target = $region56
      $region55: #{bottleneck_forward_nhwc.1} parent=5 // pred_region
        %s1984 = ssub.s32 %s16, 2
        // Predicated region
        $region57: #{bottleneck_forward_nhwc.1} parent=55 // pred_check
          %p1985 = pneg %p197
        $region58: #{bottleneck_forward_nhwc.1} parent=55 // pred_check_branch
          %1987 = sbr.rel (%p1985) target = $region60
        $region59: #{bottleneck_forward_nhwc.1} parent=55 // pred_region
          %s1988 = sand.u32 %s182, 1
          %s1989 = scalar_lea.sflag [#allocation3], %s1988
          %s1990 = sand.u32 %s182, 1
          %s1991 = smul.addr %s1990, 256
          %s1992 = scalar_lea.vmem [#allocation2], %s1991
          %1994 = dma.done %s1989, 4096
        $region60: #{bottleneck_forward_nhwc.1} parent=55 // pred_fallthru
          _
      $region56: #{bottleneck_forward_nhwc.1} parent=5 // pred_fallthru
        _
    $region6: #{bottleneck_forward_nhwc.1} parent=1 // loop_footer
      %s20 = sadd.s32 1, %s16
    $region7: #{bottleneck_forward_nhwc.1} parent=1 // loop_footer_branch
      %15 = sbr.rel target = $region3
    $region8: #{bottleneck_forward_nhwc.1} parent=1 // loop_exit
      _
    %1995 = vsyncpa [#allocation3], 1
    %s1996 = scalar_lea.sflag [#allocation3], 1
    %1997 = vsyncpa %s1996, 1

</llo_original>
